<compile_context>
chip_gen: v7x
topology: tpu7x:2x2x1
jax: 0.10.0
libtpu: 0.0.40
codegen_flags: <defaults>
</compile_context>

<pallas_src>
import functools

import jax
import jax.numpy as jnp
from jax.experimental import pallas as pl
from jax.experimental.pallas import tpu as pltpu

_LANE = 128


def _round_up(x, m):
    return (x + m - 1) // m * m


def _vmem_capacity_bytes():
    try:
        return int(pltpu.get_tpu_info().vmem_capacity_bytes)
    except Exception:
        return 64 << 20  # conservative fallback = v7x per-TC capacity


def _resident_spec(block_shape):
    """BlockSpec for weights/biases: constant index map -> single-buffered."""
    idx = lambda i: (0, 0)
    try:
        return pl.BlockSpec(block_shape, idx, pipeline_mode=pl.Buffered(1))
    except Exception:  # older JAX without pipeline_mode / Buffered
        return pl.BlockSpec(block_shape, idx)


def _mlp_kernel(x_ref, *refs, num_layers, sigmoid_output, compute_dtype):
    """Fused MLP on one row tile. refs = (w0, b0, ..., w_{L-1}, b_{L-1}, out)."""
    out_ref = refs[-1]
    wb = refs[:-1]
    exact_f32 = jnp.dtype(compute_dtype) == jnp.dtype(jnp.float32)
    prec = jax.lax.Precision.HIGHEST if exact_f32 else None
    h = x_ref[...].astype(compute_dtype)
    for i in range(num_layers):
        w = wb[2 * i][...]                       # [Din_p, Dout_p] compute_dtype
        b = wb[2 * i + 1][...]                   # [1, Dout_p] f32
        y = jnp.dot(h, w, preferred_element_type=jnp.float32, precision=prec)
        y = y + b                                # bias / activations in f32
        if i < num_layers - 1:
            h = jnp.maximum(y, 0.0).astype(compute_dtype)
        else:
            if sigmoid_output:
                if exact_f32:
                    y = jax.nn.sigmoid(y)
                else:
                    # EUP exp + approx reciprocal keeps the epilogue off the VALU.
                    y = pl.reciprocal(1.0 + jnp.exp(-y), approx=True)
            out_ref[...] = y.astype(out_ref.dtype)


def prepare_mlp_params(params, compute_dtype=jnp.bfloat16):
    """Pad every feature dim to 128 lanes and cast ONCE (hoisted out of the
    per-call path). params: list of (w [D_in, D_out], b [D_out])."""
    dpad = [_round_up(params[0][0].shape[0], _LANE)] + \
           [_round_up(w.shape[1], _LANE) for (w, _) in params]
    padded = []
    for i, (w, b) in enumerate(params):
        din, dout = w.shape
        w_p = jnp.zeros((dpad[i], dpad[i + 1]), compute_dtype)
        w_p = w_p.at[:din, :dout].set(w.astype(compute_dtype))
        b_p = jnp.zeros((1, dpad[i + 1]), jnp.float32)
        b_p = b_p.at[0, :dout].set(b.astype(jnp.float32))
        padded += [w_p, b_p]
    return tuple(padded)


@functools.partial(
    jax.jit,
    static_argnames=("d_out", "sigmoid_output", "compute_dtype", "tm", "out_dtype"))
def mlp_forward(x, padded_params, *, d_out, sigmoid_output=False,
                compute_dtype=jnp.bfloat16, tm=512, out_dtype=None):
    """x: [..., D_in]; padded_params: output of prepare_mlp_params."""
    num_layers = len(padded_params) // 2
    dpad = [padded_params[2 * i].shape[0] for i in range(num_layers)]
    dpad.append(padded_params[-2].shape[1])

    lead = x.shape[:-1]
    d_in = x.shape[-1]
    assert d_in <= dpad[0], "input feature dim larger than prepared weights"
    B = 1
    for s in lead:
        B *= s

    x2 = x.reshape(B, d_in).astype(compute_dtype)
    if d_in != dpad[0]:                           # zero lane-pad of D_in only
        x2 = jnp.pad(x2, ((0, 0), (0, dpad[0] - d_in)))

    if out_dtype is None:
        out_dtype = x.dtype
    itemsize_c = jnp.dtype(compute_dtype).itemsize
    itemsize_o = jnp.dtype(out_dtype).itemsize

    # Row tile: bf16 packs 16 sublanes/vreg; cap at ceil(B/2) so the batch grid
    # has >= 2 steps whenever the batch allows (v7x two-TC megacore + overlap).
    sub = 16 if (jnp.dtype(compute_dtype) == jnp.dtype(jnp.bfloat16)
                 and B >= 16) else 8
    tm_eff = _round_up(min(tm, B), sub)
    if B > sub:
        tm_eff = min(tm_eff, _round_up(pl.cdiv(B, 2), sub))

    # Capacity-aware VMEM budget: weights/biases single-buffered, x/out tiles
    # double-buffered, plus f32 activation scratch.
    weight_bytes = sum(dpad[i] * dpad[i + 1] * itemsize_c + dpad[i + 1] * 4
                       for i in range(num_layers))

    def _io_bytes(t):
        return (2 * t * dpad[0] * itemsize_c + 2 * t * dpad[-1] * itemsize_o
                + 2 * t * max(dpad) * 4)

    budget = int(_vmem_capacity_bytes() * 0.9)
    while tm_eff > sub and weight_bytes + _io_bytes(tm_eff) > budget:
        tm_eff = max(sub, _round_up(tm_eff // 2, sub))
    # TODO(synk): if weight_bytes alone approaches the budget (big hidden dims
    # on v7x's 64 MiB VMEM), add a D_out grid axis streaming tn~512 weight
    # tiles per layer, and compress weights to int8 (v5e/v6e) / fp8 (v7x) with
    # per-channel scales for the bandwidth-bound small-batch regime.
    vmem_limit = int(min(max(weight_bytes + _io_bytes(tm_eff) + (8 << 20),
                             32 << 20),
                         budget))

    grid = (pl.cdiv(B, tm_eff),)

    in_specs = [pl.BlockSpec((tm_eff, dpad[0]), lambda i: (i, 0))]
    for li in range(num_layers):
        in_specs.append(_resident_spec((dpad[li], dpad[li + 1])))
        in_specs.append(_resident_spec((1, dpad[li + 1])))
    out_specs = pl.BlockSpec((tm_eff, dpad[-1]), lambda i: (i, 0))

    rows = grid[0] * tm_eff
    flops = int(sum(2 * rows * dpad[li] * dpad[li + 1]
                    for li in range(num_layers)))
    transcendentals = int(rows * dpad[-1]) if sigmoid_output else 0
    bytes_accessed = int(x2.size * itemsize_c
                         + sum(a.size * a.dtype.itemsize for a in padded_params)
                         + B * dpad[-1] * itemsize_o)

    kernel = functools.partial(
        _mlp_kernel, num_layers=num_layers,
        sigmoid_output=sigmoid_output, compute_dtype=compute_dtype)

    out_pad = pl.pallas_call(
        kernel,
        out_shape=jax.ShapeDtypeStruct((B, dpad[-1]), out_dtype),
        grid_spec=pltpu.PrefetchScalarGridSpec(
            num_scalar_prefetch=0,
            grid=grid,
            in_specs=in_specs,
            out_specs=out_specs,
        ),
        compiler_params=pltpu.CompilerParams(
            dimension_semantics=("parallel",),
            vmem_limit_bytes=vmem_limit,
        ),
        cost_estimate=pl.CostEstimate(
            flops=flops, transcendentals=transcendentals,
            bytes_accessed=bytes_accessed),
    )(x2, *padded_params)

    return out_pad[:, :d_out].reshape(*lead, d_out)


class MLPPallas:
    """Mirrors the PyTorch MLP: num_layers Linear layers, ReLU between,
    optional sigmoid on the output. Master params kept in f32; lane-padded /
    cast copies are prepared once per compute dtype and cached."""

    def __init__(self, input_dim, hidden_dim, output_dim, num_layers,
                 sigmoid_output=False, key=jax.random.PRNGKey(0)):
        self.num_layers = num_layers
        self.sigmoid_output = sigmoid_output
        self.input_dim = input_dim
        self.output_dim = output_dim
        dims_in = [input_dim] + [hidden_dim] * (num_layers - 1)
        dims_out = [hidden_dim] * (num_layers - 1) + [output_dim]
        self.params = []
        for n, k in zip(dims_in, dims_out):
            key, kw, kb = jax.random.split(key, 3)
            bound = 1.0 / float(n) ** 0.5  # matches nn.Linear's uniform bound
            w = jax.random.uniform(kw, (n, k), jnp.float32, -bound, bound)
            b = jax.random.uniform(kb, (k,), jnp.float32, -bound, bound)
            self.params.append((w, b))
        self._prepared = {}

    def _get_prepared(self, compute_dtype):
        name = jnp.dtype(compute_dtype).name
        if name not in self._prepared:
            self._prepared[name] = prepare_mlp_params(self.params, compute_dtype)
        return self._prepared[name]

    def __call__(self, x, *, compute_dtype=jnp.bfloat16, tm=512, out_dtype=None):
        assert x.shape[-1] == self.input_dim
        return mlp_forward(x, self._get_prepared(compute_dtype),
                           d_out=self.output_dim,
                           sigmoid_output=self.sigmoid_output,
                           compute_dtype=compute_dtype, tm=tm,
                           out_dtype=out_dtype)


def _reference(x, params, num_layers, sigmoid_output):
    """Pure-JAX f32 reference of the PyTorch forward."""
    for i, (w, b) in enumerate(params):
        x = x @ w + b
        if i < num_layers - 1:
            x = jnp.maximum(x, 0.0)
    if sigmoid_output:
        x = jax.nn.sigmoid(x)
    return x


if __name__ == "__main__":
    key = jax.random.PRNGKey(0)
    kx, kx2, kp = jax.random.split(key, 3)

    batch, input_dim, hidden_dim, output_dim, num_layers = 8, 16, 32, 8, 3
    sigmoid_output = True

    x = jax.random.normal(kx, (batch, input_dim), jnp.float32)

    mlp = MLPPallas(input_dim, hidden_dim, output_dim, num_layers,
                    sigmoid_output=sigmoid_output, key=kp)

    ref = _reference(x, mlp.params, num_layers, sigmoid_output)

    # Exact-math path (f32, Precision.HIGHEST): tight tolerance vs reference.
    out_f32 = jax.block_until_ready(mlp(x, compute_dtype=jnp.float32))
    assert out_f32.shape == (batch, output_dim)
    assert jnp.allclose(out_f32, ref, atol=1e-4, rtol=1e-4), \
        "f32 mismatch vs reference"

    # MXU-native bf16 path (f32 accumulation, approx-sigmoid epilogue).
    out_bf16 = jax.block_until_ready(mlp(x, compute_dtype=jnp.bfloat16))
    assert out_bf16.shape == (batch, output_dim)
    assert jnp.allclose(out_bf16, ref, atol=3e-2, rtol=3e-2), \
        "bf16 mismatch vs reference"

    # Larger batch: exercises the 16-sublane bf16 tile and a >=2-step grid.
    xb = jax.random.normal(kx2, (64, input_dim), jnp.float32)
    refb = _reference(xb, mlp.params, num_layers, sigmoid_output)
    outb = jax.block_until_ready(mlp(xb, compute_dtype=jnp.bfloat16))
    assert outb.shape == (64, output_dim)
    assert jnp.allclose(outb, refb, atol=3e-2, rtol=3e-2), \
        "bf16 (batch=64) mismatch vs reference"

    print("KERNEL_OK")
</pallas_src>

<mosaic_0001>
module attributes {stable_mosaic.version = 11 : i64} {
  func.func @_mlp_kernel(%arg0: i32, %arg1: memref<8x128xf32, #tpu.memory_space<vmem>>, %arg2: memref<128x128xf32, #tpu.memory_space<vmem>>, %arg3: memref<1x128xf32, #tpu.memory_space<vmem>>, %arg4: memref<128x128xf32, #tpu.memory_space<vmem>>, %arg5: memref<1x128xf32, #tpu.memory_space<vmem>>, %arg6: memref<128x128xf32, #tpu.memory_space<vmem>>, %arg7: memref<1x128xf32, #tpu.memory_space<vmem>>, %arg8: memref<8x128xf32, #tpu.memory_space<vmem>>) attributes {dimension_semantics = [#tpu.dimension_semantics<parallel>], iteration_bounds = array<i64: 1>, scalar_prefetch = 0 : i64, scratch_operands = 0 : i64, tpu.core_type = #tpu.core_type<tc>, window_params = [{transform_indices = @transform_0, window_bounds = array<i64: 8, 128>}, {pipeline_mode = #tpu.pipeline_mode<synchronous>, transform_indices = @transform_1, window_bounds = array<i64: 128, 128>}, {pipeline_mode = #tpu.pipeline_mode<synchronous>, transform_indices = @transform_2, window_bounds = array<i64: 1, 128>}, {pipeline_mode = #tpu.pipeline_mode<synchronous>, transform_indices = @transform_3, window_bounds = array<i64: 128, 128>}, {pipeline_mode = #tpu.pipeline_mode<synchronous>, transform_indices = @transform_4, window_bounds = array<i64: 1, 128>}, {pipeline_mode = #tpu.pipeline_mode<synchronous>, transform_indices = @transform_5, window_bounds = array<i64: 128, 128>}, {pipeline_mode = #tpu.pipeline_mode<synchronous>, transform_indices = @transform_6, window_bounds = array<i64: 1, 128>}, {transform_indices = @transform_7, window_bounds = array<i64: 8, 128>}]} {
    %c0 = arith.constant 0 : index
    %c0_0 = arith.constant 0 : index
    %0 = vector.load %arg1[%c0, %c0_0] : memref<8x128xf32, #tpu.memory_space<vmem>>, vector<8x128xf32>
    %c0_1 = arith.constant 0 : index
    %c0_2 = arith.constant 0 : index
    %1 = vector.load %arg2[%c0_1, %c0_2] : memref<128x128xf32, #tpu.memory_space<vmem>>, vector<128x128xf32>
    %c0_3 = arith.constant 0 : index
    %c0_4 = arith.constant 0 : index
    %2 = vector.load %arg3[%c0_3, %c0_4] : memref<1x128xf32, #tpu.memory_space<vmem>>, vector<1x128xf32>
    %cst = arith.constant dense<0.000000e+00> : vector<8x128xf32>
    %3 = tpu.matmul %0, %1, %cst {dimension_numbers = #tpu.dot_dimension_numbers<[1], [0], [0], [1], [0, 0, 1, 1], [], []>, precision = #tpu.contract_precision<fp32>} : vector<8x128xf32>, vector<128x128xf32>, vector<8x128xf32> -> vector<8x128xf32>
    %4 = vector.broadcast %2 : vector<1x128xf32> to vector<8x128xf32>
    %5 = arith.addf %3, %4 : vector<8x128xf32>
    %cst_5 = arith.constant 0.000000e+00 : f32
    %6 = vector.broadcast %cst_5 : f32 to vector<8x128xf32>
    %7 = arith.maximumf %5, %6 : vector<8x128xf32>
    %c0_6 = arith.constant 0 : index
    %c0_7 = arith.constant 0 : index
    %8 = vector.load %arg4[%c0_6, %c0_7] : memref<128x128xf32, #tpu.memory_space<vmem>>, vector<128x128xf32>
    %c0_8 = arith.constant 0 : index
    %c0_9 = arith.constant 0 : index
    %9 = vector.load %arg5[%c0_8, %c0_9] : memref<1x128xf32, #tpu.memory_space<vmem>>, vector<1x128xf32>
    %cst_10 = arith.constant dense<0.000000e+00> : vector<8x128xf32>
    %10 = tpu.matmul %7, %8, %cst_10 {dimension_numbers = #tpu.dot_dimension_numbers<[1], [0], [0], [1], [0, 0, 1, 1], [], []>, precision = #tpu.contract_precision<fp32>} : vector<8x128xf32>, vector<128x128xf32>, vector<8x128xf32> -> vector<8x128xf32>
    %11 = vector.broadcast %9 : vector<1x128xf32> to vector<8x128xf32>
    %12 = arith.addf %10, %11 : vector<8x128xf32>
    %cst_11 = arith.constant 0.000000e+00 : f32
    %13 = vector.broadcast %cst_11 : f32 to vector<8x128xf32>
    %14 = arith.maximumf %12, %13 : vector<8x128xf32>
    %c0_12 = arith.constant 0 : index
    %c0_13 = arith.constant 0 : index
    %15 = vector.load %arg6[%c0_12, %c0_13] : memref<128x128xf32, #tpu.memory_space<vmem>>, vector<128x128xf32>
    %c0_14 = arith.constant 0 : index
    %c0_15 = arith.constant 0 : index
    %16 = vector.load %arg7[%c0_14, %c0_15] : memref<1x128xf32, #tpu.memory_space<vmem>>, vector<1x128xf32>
    %cst_16 = arith.constant dense<0.000000e+00> : vector<8x128xf32>
    %17 = tpu.matmul %14, %15, %cst_16 {dimension_numbers = #tpu.dot_dimension_numbers<[1], [0], [0], [1], [0, 0, 1, 1], [], []>, precision = #tpu.contract_precision<fp32>} : vector<8x128xf32>, vector<128x128xf32>, vector<8x128xf32> -> vector<8x128xf32>
    %18 = vector.broadcast %16 : vector<1x128xf32> to vector<8x128xf32>
    %19 = arith.addf %17, %18 : vector<8x128xf32>
    %20 = arith.negf %19 : vector<8x128xf32>
    %21 = math.exp %20 : vector<8x128xf32>
    %cst_17 = arith.constant 1.000000e+00 : f32
    %22 = vector.broadcast %cst_17 : f32 to vector<8x128xf32>
    %23 = arith.addf %22, %21 : vector<8x128xf32>
    %24 = arith.divf %22, %23 : vector<8x128xf32>
    %c0_18 = arith.constant 0 : index
    %c0_19 = arith.constant 0 : index
    %25 = vector.load %arg8[%c0_18, %c0_19] : memref<8x128xf32, #tpu.memory_space<vmem>>, vector<8x128xf32>
    tpu.vector_store %arg8[%c0_18, %c0_19], %24 {strides = array<i32>} : memref<8x128xf32, #tpu.memory_space<vmem>>, vector<8x128xf32>,
    return
  }
  func.func @transform_0(%arg0: i32) -> (i32, i32) {
    %c0_i32 = arith.constant 0 : i32
    %c0_i32_0 = arith.constant 0 : i32
    return %arg0, %c0_i32 : i32, i32
  }
  func.func @transform_1(%arg0: i32) -> (i32, i32) {
    %c0_i32 = arith.constant 0 : i32
    %c0_i32_0 = arith.constant 0 : i32
    %c0_i32_1 = arith.constant 0 : i32
    return %c0_i32, %c0_i32_0 : i32, i32
  }
  func.func @transform_2(%arg0: i32) -> (i32, i32) {
    %c0_i32 = arith.constant 0 : i32
    %c0_i32_0 = arith.constant 0 : i32
    %c0_i32_1 = arith.constant 0 : i32
    return %c0_i32, %c0_i32_0 : i32, i32
  }
  func.func @transform_3(%arg0: i32) -> (i32, i32) {
    %c0_i32 = arith.constant 0 : i32
    %c0_i32_0 = arith.constant 0 : i32
    %c0_i32_1 = arith.constant 0 : i32
    return %c0_i32, %c0_i32_0 : i32, i32
  }
  func.func @transform_4(%arg0: i32) -> (i32, i32) {
    %c0_i32 = arith.constant 0 : i32
    %c0_i32_0 = arith.constant 0 : i32
    %c0_i32_1 = arith.constant 0 : i32
    return %c0_i32, %c0_i32_0 : i32, i32
  }
  func.func @transform_5(%arg0: i32) -> (i32, i32) {
    %c0_i32 = arith.constant 0 : i32
    %c0_i32_0 = arith.constant 0 : i32
    %c0_i32_1 = arith.constant 0 : i32
    return %c0_i32, %c0_i32_0 : i32, i32
  }
  func.func @transform_6(%arg0: i32) -> (i32, i32) {
    %c0_i32 = arith.constant 0 : i32
    %c0_i32_0 = arith.constant 0 : i32
    %c0_i32_1 = arith.constant 0 : i32
    return %c0_i32, %c0_i32_0 : i32, i32
  }
  func.func @transform_7(%arg0: i32) -> (i32, i32) {
    %c0_i32 = arith.constant 0 : i32
    %c0_i32_0 = arith.constant 0 : i32
    return %arg0, %c0_i32 : i32, i32
  }
}

</mosaic_0001>

<llo_original>
// kernel: mlp_forward.1
$region0: #{mlp_forward.1}
  #allocation0 [shape = 'u32[]', space=smem, size = 0x4, offset = 0x4, fixed_abs, tag = 'smem constant byte address 0x4 - core index']
  #allocation1 [shape = 'u32[144,128]{1,0:T(1,128)}', space=vmem, size = 0x12000, scoped, tag = 'internal scratch']
  %s0 = inlined_call_operand.vmem [shape: f32[8,128], index: 0, kind: input, shape index: {}]
  %s1 = inlined_call_operand.hbm [shape: f32[128,128], index: 1, kind: input, shape index: {}]
  %s2 = inlined_call_operand.vmem [shape: f32[1,128], index: 2, kind: input, shape index: {}]
  %s3 = inlined_call_operand.hbm [shape: f32[128,128], index: 3, kind: input, shape index: {}]
  %s4 = inlined_call_operand.vmem [shape: f32[1,128], index: 4, kind: input, shape index: {}]
  %s5 = inlined_call_operand.hbm [shape: f32[128,128], index: 5, kind: input, shape index: {}]
  %s6 = inlined_call_operand.vmem [shape: f32[1,128], index: 6, kind: input, shape index: {}]
  %s7 = inlined_call_operand.hbm [shape: f32[8,128], index: 7, kind: output, shape index: {}]
  %s8 = sld [smem:[#allocation0]]
  $region50: #{mlp_forward.1} parent=0
    _
  %s10 = ssub.s32 1, %s8
  %s11 = scalar_select 0, %s10, %s8
  $region1: #{mlp_forward.1} parent=0
    #allocation2 [shape = 'u8[65536]{0}', space=vmem, size = 0x10000, scoped, tag = 'input window, operand 1, single buffered']
    #allocation3 [shape = 's32[1]{0}', space=sflag, size = 0x4, scoped, tag = 'scoped memory for mlp_forward.1']
    #allocation4 [shape = 's32[1]{0}', space=sflag, size = 0x4, scoped, tag = 'scoped memory for mlp_forward.1']
    #allocation5 [shape = 'u8[65536]{0}', space=vmem, size = 0x10000, scoped, tag = 'input window, operand 3, single buffered']
    #allocation6 [shape = 's32[1]{0}', space=sflag, size = 0x4, scoped, tag = 'scoped memory for mlp_forward.1']
    #allocation7 [shape = 'u8[65536]{0}', space=vmem, size = 0x10000, scoped, tag = 'input window, operand 5, single buffered']
    #allocation8 [shape = 'u8[4096]{0}', space=vmem, size = 0x1000, scoped, tag = 'output window, operand 0, single buffered']
    %12 = vsyncpa [#allocation3], 0
    %13 = vsyncpa [#allocation6], 0
    %14 = vsyncpa [#allocation4], 0
    // Predicated region
    $region2: #{mlp_forward.1} parent=1 // pred_check
      _
    $region3: #{mlp_forward.1} parent=1 // pred_check_branch
      %16 = sbr.rel (0) target = $region5
    $region4: #{mlp_forward.1} parent=1 // pred_region
      _
    $region5: #{mlp_forward.1} parent=1 // pred_fallthru
      _
    // Predicated region
    $region6: #{mlp_forward.1} parent=1 // pred_check
      _
    $region7: #{mlp_forward.1} parent=1 // pred_check_branch
      %18 = sbr.rel (0) target = $region9
    $region8: #{mlp_forward.1} parent=1 // pred_region
      %s20 = ssub.s32 2048, 2048
      %21 = vsyncadd [#allocation3], %s20
      %s22 = sshll.u32 [#allocation2], 4
      %s23 = int_to_ptr.vmem [resolvable:$true] %s22
      %28 = dma.hbm_to_vmem [thread:$0]  %s1, 2048, %s23, [#allocation3], 128, 128, 8
    $region9: #{mlp_forward.1} parent=1 // pred_fallthru
      _
    // Predicated region
    $region10: #{mlp_forward.1} parent=1 // pred_check
      _
    $region11: #{mlp_forward.1} parent=1 // pred_check_branch
      %30 = sbr.rel (0) target = $region13
    $region12: #{mlp_forward.1} parent=1 // pred_region
      _
    $region13: #{mlp_forward.1} parent=1 // pred_fallthru
      _
    // Predicated region
    $region14: #{mlp_forward.1} parent=1 // pred_check
      _
    $region15: #{mlp_forward.1} parent=1 // pred_check_branch
      %32 = sbr.rel (0) target = $region17
    $region16: #{mlp_forward.1} parent=1 // pred_region
      %s34 = ssub.s32 2048, 2048
      %35 = vsyncadd [#allocation6], %s34
      %s36 = sshll.u32 [#allocation5], 4
      %s37 = int_to_ptr.vmem [resolvable:$true] %s36
      %42 = dma.hbm_to_vmem [thread:$0]  %s3, 2048, %s37, [#allocation6], 128, 128, 8
    $region17: #{mlp_forward.1} parent=1 // pred_fallthru
      _
    // Predicated region
    $region18: #{mlp_forward.1} parent=1 // pred_check
      _
    $region19: #{mlp_forward.1} parent=1 // pred_check_branch
      %44 = sbr.rel (0) target = $region21
    $region20: #{mlp_forward.1} parent=1 // pred_region
      _
    $region21: #{mlp_forward.1} parent=1 // pred_fallthru
      _
    // Predicated region
    $region22: #{mlp_forward.1} parent=1 // pred_check
      _
    $region23: #{mlp_forward.1} parent=1 // pred_check_branch
      %46 = sbr.rel (0) target = $region25
    $region24: #{mlp_forward.1} parent=1 // pred_region
      %s48 = ssub.s32 2048, 2048
      %49 = vsyncadd [#allocation6], %s48
      %s50 = sshll.u32 [#allocation7], 4
      %s51 = int_to_ptr.vmem [resolvable:$true] %s50
      %56 = dma.hbm_to_vmem [thread:$0]  %s5, 2048, %s51, [#allocation6], 128, 128, 8
    $region25: #{mlp_forward.1} parent=1 // pred_fallthru
      _
    // Predicated region
    $region26: #{mlp_forward.1} parent=1 // pred_check
      _
    $region27: #{mlp_forward.1} parent=1 // pred_check_branch
      %58 = sbr.rel (0) target = $region29
    $region28: #{mlp_forward.1} parent=1 // pred_region
      _
    $region29: #{mlp_forward.1} parent=1 // pred_fallthru
      _
    // Predicated region
    $region30: #{mlp_forward.1} parent=1 // pred_check
      _
    $region31: #{mlp_forward.1} parent=1 // pred_check_branch
      %60 = sbr.rel (0) target = $region33
    $region32: #{mlp_forward.1} parent=1 // pred_region
      %61 = dma.done [#allocation3], 2048
    $region33: #{mlp_forward.1} parent=1 // pred_fallthru
      _
    // Predicated region
    $region34: #{mlp_forward.1} parent=1 // pred_check
      _
    $region35: #{mlp_forward.1} parent=1 // pred_check_branch
      %63 = sbr.rel (0) target = $region37
    $region36: #{mlp_forward.1} parent=1 // pred_region
      %64 = dma.done [#allocation6], 2048
    $region37: #{mlp_forward.1} parent=1 // pred_fallthru
      _
    // Predicated region
    $region38: #{mlp_forward.1} parent=1 // pred_check
      _
    $region39: #{mlp_forward.1} parent=1 // pred_check_branch
      %66 = sbr.rel (0) target = $region41
    $region40: #{mlp_forward.1} parent=1 // pred_region
      %67 = dma.done [#allocation6], 2048
    $region41: #{mlp_forward.1} parent=1 // pred_fallthru
      _
    %v68 = vld [vmem:[%s0] sm:$0xff]
    %v69 = vld [vmem:[#allocation2] sm:$0xff]
    %v70 = vld [vmem:[#allocation2 + $0x8] sm:$0xff]
    %v71 = vld [vmem:[#allocation2 + $0x10] sm:$0xff]
    %v72 = vld [vmem:[#allocation2 + $0x18] sm:$0xff]
    %v73 = vld [vmem:[#allocation2 + $0x20] sm:$0xff]
    %v74 = vld [vmem:[#allocation2 + $0x28] sm:$0xff]
    %v75 = vld [vmem:[#allocation2 + $0x30] sm:$0xff]
    %v76 = vld [vmem:[#allocation2 + $0x38] sm:$0xff]
    %v77 = vld [vmem:[#allocation2 + $0x40] sm:$0xff]
    %v78 = vld [vmem:[#allocation2 + $0x48] sm:$0xff]
    %v79 = vld [vmem:[#allocation2 + $0x50] sm:$0xff]
    %v80 = vld [vmem:[#allocation2 + $0x58] sm:$0xff]
    %v81 = vld [vmem:[#allocation2 + $0x60] sm:$0xff]
    %v82 = vld [vmem:[#allocation2 + $0x68] sm:$0xff]
    %v83 = vld [vmem:[#allocation2 + $0x70] sm:$0xff]
    %v84 = vld [vmem:[#allocation2 + $0x78] sm:$0xff]
    %v85 = vld [vmem:[%s2] sm:$0x1]
    %v87 = vlaneseq
    %v88 = vshrl.u32 %v87, 7
    %v89 = vsub.s32 0, %v88
    %v90 = vrot.slane %v85, %v89
    %92 = vmatprep.subr.mxu0 0.0
    %v93 = vand.u32 %v69, 4294901760
    %94 = vmatpush1.msra.mxu0 %v93
    %95 = vmatprep.subr.mxu0 0.0
    %v96 = vand.u32 %v70, 4294901760
    %97 = vmatpush1.msra.mxu0 %v96
    %98 = vmatprep.subr.mxu0 0.0
    %v99 = vand.u32 %v71, 4294901760
    %100 = vmatpush1.msra.mxu0 %v99
    %101 = vmatprep.subr.mxu0 0.0
    %v102 = vand.u32 %v72, 4294901760
    %103 = vmatpush1.msra.mxu0 %v102
    %104 = vmatprep.subr.mxu0 0.0
    %v105 = vand.u32 %v73, 4294901760
    %106 = vmatpush1.msra.mxu0 %v105
    %107 = vmatprep.subr.mxu0 0.0
    %v108 = vand.u32 %v74, 4294901760
    %109 = vmatpush1.msra.mxu0 %v108
    %110 = vmatprep.subr.mxu0 0.0
    %v111 = vand.u32 %v75, 4294901760
    %112 = vmatpush1.msra.mxu0 %v111
    %113 = vmatprep.subr.mxu0 0.0
    %v114 = vand.u32 %v76, 4294901760
    %115 = vmatpush1.msra.mxu0 %v114
    %116 = vmatprep.subr.mxu0 0.0
    %v117 = vand.u32 %v77, 4294901760
    %118 = vmatpush1.msra.mxu0 %v117
    %119 = vmatprep.subr.mxu0 0.0
    %v120 = vand.u32 %v78, 4294901760
    %121 = vmatpush1.msra.mxu0 %v120
    %122 = vmatprep.subr.mxu0 0.0
    %v123 = vand.u32 %v79, 4294901760
    %124 = vmatpush1.msra.mxu0 %v123
    %125 = vmatprep.subr.mxu0 0.0
    %v126 = vand.u32 %v80, 4294901760
    %127 = vmatpush1.msra.mxu0 %v126
    %128 = vmatprep.subr.mxu0 0.0
    %v129 = vand.u32 %v81, 4294901760
    %130 = vmatpush1.msra.mxu0 %v129
    %131 = vmatprep.subr.mxu0 0.0
    %v132 = vand.u32 %v82, 4294901760
    %133 = vmatpush1.msra.mxu0 %v132
    %134 = vmatprep.subr.mxu0 0.0
    %v135 = vand.u32 %v83, 4294901760
    %136 = vmatpush1.msra.mxu0 %v135
    %137 = vmatprep.subr.mxu0 0.0
    %v138 = vand.u32 %v84, 4294901760
    %139 = vmatpush1.msra.mxu0 %v138
    %140 = vmatprep.subr.mxu0 0.0
    %141 = vmatpush1.msra.mxu0 0.0
    %142 = vmatprep.subr.mxu0 0.0
    %143 = vmatpush1.msra.mxu0 0.0
    %144 = vmatprep.subr.mxu0 0.0
    %145 = vmatpush1.msra.mxu0 0.0
    %146 = vmatprep.subr.mxu0 0.0
    %147 = vmatpush1.msra.mxu0 0.0
    %148 = vmatprep.subr.mxu0 0.0
    %149 = vmatpush1.msra.mxu0 0.0
    %150 = vmatprep.subr.mxu0 0.0
    %151 = vmatpush1.msra.mxu0 0.0
    %152 = vmatprep.subr.mxu0 0.0
    %153 = vmatpush1.msra.mxu0 0.0
    %154 = vmatprep.subr.mxu0 0.0
    %155 = vmatpush1.msra.mxu0 0.0
    %156 = vmatprep.subr.mxu0 0.0
    %157 = vmatpush1.msra.mxu0 0.0
    %158 = vmatprep.subr.mxu0 0.0
    %159 = vmatpush1.msra.mxu0 0.0
    %160 = vmatprep.subr.mxu0 0.0
    %161 = vmatpush1.msra.mxu0 0.0
    %162 = vmatprep.subr.mxu0 0.0
    %163 = vmatpush1.msra.mxu0 0.0
    %164 = vmatprep.subr.mxu0 0.0
    %165 = vmatpush1.msra.mxu0 0.0
    %166 = vmatprep.subr.mxu0 0.0
    %167 = vmatpush1.msra.mxu0 0.0
    %168 = vmatprep.subr.mxu0 0.0
    %169 = vmatpush1.msra.mxu0 0.0
    %170 = vmatprep.subr.mxu0 0.0
    %171 = vmatpush1.msra.mxu0 0.0
    %172 = vmatprep.mubr.f32.mxu0 0.0
    %v173 = vand.u32 %v68, 4294901760
    %v174 = vsub.f32 %v68, %v173
    %v175 = vand.u32 %v174, 4294901760
    %v176 = vsub.f32 %v174, %v175
    %v177 = vand.u32 %v176, 4294901760
    %178 = vmatmul.mubr.f32.gmra.mrb[0].mxu0 %v177
    %v179 = vpop.f32.mrb[0].mxu0
    %v180 = vadd.f32 %v90, %v179
    %v181 = vpop.f32.mrb[0].mxu0
    %182 = vdwg.mxu0
    %183 = vmatprep.subr.mxu0 0.0
    %v184 = vand.u32 %v69, 4294901760
    %v185 = vsub.f32 %v69, %v184
    %v186 = vand.u32 %v185, 4294901760
    %v187 = vsub.f32 %v185, %v186
    %v188 = vand.u32 %v187, 4294901760
    %189 = vmatpush1.msra.mxu0 %v188
    %190 = vmatprep.subr.mxu0 0.0
    %v191 = vand.u32 %v70, 4294901760
    %v192 = vsub.f32 %v70, %v191
    %v193 = vand.u32 %v192, 4294901760
    %v194 = vsub.f32 %v192, %v193
    %v195 = vand.u32 %v194, 4294901760
    %196 = vmatpush1.msra.mxu0 %v195
    %197 = vmatprep.subr.mxu0 0.0
    %v198 = vand.u32 %v71, 4294901760
    %v199 = vsub.f32 %v71, %v198
    %v200 = vand.u32 %v199, 4294901760
    %v201 = vsub.f32 %v199, %v200
    %v202 = vand.u32 %v201, 4294901760
    %203 = vmatpush1.msra.mxu0 %v202
    %204 = vmatprep.subr.mxu0 0.0
    %v205 = vand.u32 %v72, 4294901760
    %v206 = vsub.f32 %v72, %v205
    %v207 = vand.u32 %v206, 4294901760
    %v208 = vsub.f32 %v206, %v207
    %v209 = vand.u32 %v208, 4294901760
    %210 = vmatpush1.msra.mxu0 %v209
    %211 = vmatprep.subr.mxu0 0.0
    %v212 = vand.u32 %v73, 4294901760
    %v213 = vsub.f32 %v73, %v212
    %v214 = vand.u32 %v213, 4294901760
    %v215 = vsub.f32 %v213, %v214
    %v216 = vand.u32 %v215, 4294901760
    %217 = vmatpush1.msra.mxu0 %v216
    %218 = vmatprep.subr.mxu0 0.0
    %v219 = vand.u32 %v74, 4294901760
    %v220 = vsub.f32 %v74, %v219
    %v221 = vand.u32 %v220, 4294901760
    %v222 = vsub.f32 %v220, %v221
    %v223 = vand.u32 %v222, 4294901760
    %224 = vmatpush1.msra.mxu0 %v223
    %225 = vmatprep.subr.mxu0 0.0
    %v226 = vand.u32 %v75, 4294901760
    %v227 = vsub.f32 %v75, %v226
    %v228 = vand.u32 %v227, 4294901760
    %v229 = vsub.f32 %v227, %v228
    %v230 = vand.u32 %v229, 4294901760
    %231 = vmatpush1.msra.mxu0 %v230
    %232 = vmatprep.subr.mxu0 0.0
    %v233 = vand.u32 %v76, 4294901760
    %v234 = vsub.f32 %v76, %v233
    %v235 = vand.u32 %v234, 4294901760
    %v236 = vsub.f32 %v234, %v235
    %v237 = vand.u32 %v236, 4294901760
    %238 = vmatpush1.msra.mxu0 %v237
    %239 = vmatprep.subr.mxu0 0.0
    %v240 = vand.u32 %v77, 4294901760
    %v241 = vsub.f32 %v77, %v240
    %v242 = vand.u32 %v241, 4294901760
    %v243 = vsub.f32 %v241, %v242
    %v244 = vand.u32 %v243, 4294901760
    %245 = vmatpush1.msra.mxu0 %v244
    %246 = vmatprep.subr.mxu0 0.0
    %v247 = vand.u32 %v78, 4294901760
    %v248 = vsub.f32 %v78, %v247
    %v249 = vand.u32 %v248, 4294901760
    %v250 = vsub.f32 %v248, %v249
    %v251 = vand.u32 %v250, 4294901760
    %252 = vmatpush1.msra.mxu0 %v251
    %253 = vmatprep.subr.mxu0 0.0
    %v254 = vand.u32 %v79, 4294901760
    %v255 = vsub.f32 %v79, %v254
    %v256 = vand.u32 %v255, 4294901760
    %v257 = vsub.f32 %v255, %v256
    %v258 = vand.u32 %v257, 4294901760
    %259 = vmatpush1.msra.mxu0 %v258
    %260 = vmatprep.subr.mxu0 0.0
    %v261 = vand.u32 %v80, 4294901760
    %v262 = vsub.f32 %v80, %v261
    %v263 = vand.u32 %v262, 4294901760
    %v264 = vsub.f32 %v262, %v263
    %v265 = vand.u32 %v264, 4294901760
    %266 = vmatpush1.msra.mxu0 %v265
    %267 = vmatprep.subr.mxu0 0.0
    %v268 = vand.u32 %v81, 4294901760
    %v269 = vsub.f32 %v81, %v268
    %v270 = vand.u32 %v269, 4294901760
    %v271 = vsub.f32 %v269, %v270
    %v272 = vand.u32 %v271, 4294901760
    %273 = vmatpush1.msra.mxu0 %v272
    %274 = vmatprep.subr.mxu0 0.0
    %v275 = vand.u32 %v82, 4294901760
    %v276 = vsub.f32 %v82, %v275
    %v277 = vand.u32 %v276, 4294901760
    %v278 = vsub.f32 %v276, %v277
    %v279 = vand.u32 %v278, 4294901760
    %280 = vmatpush1.msra.mxu0 %v279
    %281 = vmatprep.subr.mxu0 0.0
    %v282 = vand.u32 %v83, 4294901760
    %v283 = vsub.f32 %v83, %v282
    %v284 = vand.u32 %v283, 4294901760
    %v285 = vsub.f32 %v283, %v284
    %v286 = vand.u32 %v285, 4294901760
    %287 = vmatpush1.msra.mxu0 %v286
    %288 = vmatprep.subr.mxu0 0.0
    %v289 = vand.u32 %v84, 4294901760
    %v290 = vsub.f32 %v84, %v289
    %v291 = vand.u32 %v290, 4294901760
    %v292 = vsub.f32 %v290, %v291
    %v293 = vand.u32 %v292, 4294901760
    %294 = vmatpush1.msra.mxu0 %v293
    %295 = vmatprep.subr.mxu0 0.0
    %296 = vmatpush1.msra.mxu0 0.0
    %297 = vmatprep.subr.mxu0 0.0
    %298 = vmatpush1.msra.mxu0 0.0
    %299 = vmatprep.subr.mxu0 0.0
    %300 = vmatpush1.msra.mxu0 0.0
    %301 = vmatprep.subr.mxu0 0.0
    %302 = vmatpush1.msra.mxu0 0.0
    %303 = vmatprep.subr.mxu0 0.0
    %304 = vmatpush1.msra.mxu0 0.0
    %305 = vmatprep.subr.mxu0 0.0
    %306 = vmatpush1.msra.mxu0 0.0
    %307 = vmatprep.subr.mxu0 0.0
    %308 = vmatpush1.msra.mxu0 0.0
    %309 = vmatprep.subr.mxu0 0.0
    %310 = vmatpush1.msra.mxu0 0.0
    %311 = vmatprep.subr.mxu0 0.0
    %312 = vmatpush1.msra.mxu0 0.0
    %313 = vmatprep.subr.mxu0 0.0
    %314 = vmatpush1.msra.mxu0 0.0
    %315 = vmatprep.subr.mxu0 0.0
    %316 = vmatpush1.msra.mxu0 0.0
    %317 = vmatprep.subr.mxu0 0.0
    %318 = vmatpush1.msra.mxu0 0.0
    %319 = vmatprep.subr.mxu0 0.0
    %320 = vmatpush1.msra.mxu0 0.0
    %321 = vmatprep.subr.mxu0 0.0
    %322 = vmatpush1.msra.mxu0 0.0
    %323 = vmatprep.subr.mxu0 0.0
    %324 = vmatpush1.msra.mxu0 0.0
    %325 = vmatprep.subr.mxu0 0.0
    %326 = vmatpush1.msra.mxu0 0.0
    %327 = vmatprep.mubr.f32.mxu0 0.0
    %v328 = vand.u32 %v68, 4294901760
    %329 = vmatmul.mubr.f32.gmra.mrb[0].mxu0 %v328
    %v330 = vpop.f32.mrb[0].mxu0
    %v331 = vadd.f32 %v180, %v330
    %v332 = vpop.f32.mrb[0].mxu0
    %333 = vdwg.mxu0
    %334 = vmatprep.subr.mxu0 0.0
    %v335 = vand.u32 %v69, 4294901760
    %v336 = vsub.f32 %v69, %v335
    %337 = vmatpush1.msra.mxu0 %v336
    %338 = vmatprep.subr.mxu0 0.0
    %v339 = vand.u32 %v70, 4294901760
    %v340 = vsub.f32 %v70, %v339
    %341 = vmatpush1.msra.mxu0 %v340
    %342 = vmatprep.subr.mxu0 0.0
    %v343 = vand.u32 %v71, 4294901760
    %v344 = vsub.f32 %v71, %v343
    %345 = vmatpush1.msra.mxu0 %v344
    %346 = vmatprep.subr.mxu0 0.0
    %v347 = vand.u32 %v72, 4294901760
    %v348 = vsub.f32 %v72, %v347
    %349 = vmatpush1.msra.mxu0 %v348
    %350 = vmatprep.subr.mxu0 0.0
    %v351 = vand.u32 %v73, 4294901760
    %v352 = vsub.f32 %v73, %v351
    %353 = vmatpush1.msra.mxu0 %v352
    %354 = vmatprep.subr.mxu0 0.0
    %v355 = vand.u32 %v74, 4294901760
    %v356 = vsub.f32 %v74, %v355
    %357 = vmatpush1.msra.mxu0 %v356
    %358 = vmatprep.subr.mxu0 0.0
    %v359 = vand.u32 %v75, 4294901760
    %v360 = vsub.f32 %v75, %v359
    %361 = vmatpush1.msra.mxu0 %v360
    %362 = vmatprep.subr.mxu0 0.0
    %v363 = vand.u32 %v76, 4294901760
    %v364 = vsub.f32 %v76, %v363
    %365 = vmatpush1.msra.mxu0 %v364
    %366 = vmatprep.subr.mxu0 0.0
    %v367 = vand.u32 %v77, 4294901760
    %v368 = vsub.f32 %v77, %v367
    %369 = vmatpush1.msra.mxu0 %v368
    %370 = vmatprep.subr.mxu0 0.0
    %v371 = vand.u32 %v78, 4294901760
    %v372 = vsub.f32 %v78, %v371
    %373 = vmatpush1.msra.mxu0 %v372
    %374 = vmatprep.subr.mxu0 0.0
    %v375 = vand.u32 %v79, 4294901760
    %v376 = vsub.f32 %v79, %v375
    %377 = vmatpush1.msra.mxu0 %v376
    %378 = vmatprep.subr.mxu0 0.0
    %v379 = vand.u32 %v80, 4294901760
    %v380 = vsub.f32 %v80, %v379
    %381 = vmatpush1.msra.mxu0 %v380
    %382 = vmatprep.subr.mxu0 0.0
    %v383 = vand.u32 %v81, 4294901760
    %v384 = vsub.f32 %v81, %v383
    %385 = vmatpush1.msra.mxu0 %v384
    %386 = vmatprep.subr.mxu0 0.0
    %v387 = vand.u32 %v82, 4294901760
    %v388 = vsub.f32 %v82, %v387
    %389 = vmatpush1.msra.mxu0 %v388
    %390 = vmatprep.subr.mxu0 0.0
    %v391 = vand.u32 %v83, 4294901760
    %v392 = vsub.f32 %v83, %v391
    %393 = vmatpush1.msra.mxu0 %v392
    %394 = vmatprep.subr.mxu0 0.0
    %v395 = vand.u32 %v84, 4294901760
    %v396 = vsub.f32 %v84, %v395
    %397 = vmatpush1.msra.mxu0 %v396
    %398 = vmatprep.subr.mxu0 0.0
    %399 = vmatpush1.msra.mxu0 0.0
    %400 = vmatprep.subr.mxu0 0.0
    %401 = vmatpush1.msra.mxu0 0.0
    %402 = vmatprep.subr.mxu0 0.0
    %403 = vmatpush1.msra.mxu0 0.0
    %404 = vmatprep.subr.mxu0 0.0
    %405 = vmatpush1.msra.mxu0 0.0
    %406 = vmatprep.subr.mxu0 0.0
    %407 = vmatpush1.msra.mxu0 0.0
    %408 = vmatprep.subr.mxu0 0.0
    %409 = vmatpush1.msra.mxu0 0.0
    %410 = vmatprep.subr.mxu0 0.0
    %411 = vmatpush1.msra.mxu0 0.0
    %412 = vmatprep.subr.mxu0 0.0
    %413 = vmatpush1.msra.mxu0 0.0
    %414 = vmatprep.subr.mxu0 0.0
    %415 = vmatpush1.msra.mxu0 0.0
    %416 = vmatprep.subr.mxu0 0.0
    %417 = vmatpush1.msra.mxu0 0.0
    %418 = vmatprep.subr.mxu0 0.0
    %419 = vmatpush1.msra.mxu0 0.0
    %420 = vmatprep.subr.mxu0 0.0
    %421 = vmatpush1.msra.mxu0 0.0
    %422 = vmatprep.subr.mxu0 0.0
    %423 = vmatpush1.msra.mxu0 0.0
    %424 = vmatprep.subr.mxu0 0.0
    %425 = vmatpush1.msra.mxu0 0.0
    %426 = vmatprep.subr.mxu0 0.0
    %427 = vmatpush1.msra.mxu0 0.0
    %428 = vmatprep.subr.mxu0 0.0
    %429 = vmatpush1.msra.mxu0 0.0
    %430 = vmatprep.mubr.f32.mxu0 0.0
    %v431 = vand.u32 %v68, 4294901760
    %v432 = vsub.f32 %v68, %v431
    %433 = vmatmul.mubr.f32.gmra.mrb[0].mxu0 %v432
    %v434 = vpop.f32.mrb[0].mxu0
    %v435 = vadd.f32 %v331, %v434
    %v436 = vpop.f32.mrb[0].mxu0
    %437 = vdwg.mxu0
    %438 = vmatprep.subr.mxu0 0.0
    %v439 = vand.u32 %v69, 4294901760
    %440 = vmatpush1.msra.mxu0 %v439
    %441 = vmatprep.subr.mxu0 0.0
    %v442 = vand.u32 %v70, 4294901760
    %443 = vmatpush1.msra.mxu0 %v442
    %444 = vmatprep.subr.mxu0 0.0
    %v445 = vand.u32 %v71, 4294901760
    %446 = vmatpush1.msra.mxu0 %v445
    %447 = vmatprep.subr.mxu0 0.0
    %v448 = vand.u32 %v72, 4294901760
    %449 = vmatpush1.msra.mxu0 %v448
    %450 = vmatprep.subr.mxu0 0.0
    %v451 = vand.u32 %v73, 4294901760
    %452 = vmatpush1.msra.mxu0 %v451
    %453 = vmatprep.subr.mxu0 0.0
    %v454 = vand.u32 %v74, 4294901760
    %455 = vmatpush1.msra.mxu0 %v454
    %456 = vmatprep.subr.mxu0 0.0
    %v457 = vand.u32 %v75, 4294901760
    %458 = vmatpush1.msra.mxu0 %v457
    %459 = vmatprep.subr.mxu0 0.0
    %v460 = vand.u32 %v76, 4294901760
    %461 = vmatpush1.msra.mxu0 %v460
    %462 = vmatprep.subr.mxu0 0.0
    %v463 = vand.u32 %v77, 4294901760
    %464 = vmatpush1.msra.mxu0 %v463
    %465 = vmatprep.subr.mxu0 0.0
    %v466 = vand.u32 %v78, 4294901760
    %467 = vmatpush1.msra.mxu0 %v466
    %468 = vmatprep.subr.mxu0 0.0
    %v469 = vand.u32 %v79, 4294901760
    %470 = vmatpush1.msra.mxu0 %v469
    %471 = vmatprep.subr.mxu0 0.0
    %v472 = vand.u32 %v80, 4294901760
    %473 = vmatpush1.msra.mxu0 %v472
    %474 = vmatprep.subr.mxu0 0.0
    %v475 = vand.u32 %v81, 4294901760
    %476 = vmatpush1.msra.mxu0 %v475
    %477 = vmatprep.subr.mxu0 0.0
    %v478 = vand.u32 %v82, 4294901760
    %479 = vmatpush1.msra.mxu0 %v478
    %480 = vmatprep.subr.mxu0 0.0
    %v481 = vand.u32 %v83, 4294901760
    %482 = vmatpush1.msra.mxu0 %v481
    %483 = vmatprep.subr.mxu0 0.0
    %v484 = vand.u32 %v84, 4294901760
    %485 = vmatpush1.msra.mxu0 %v484
    %486 = vmatprep.subr.mxu0 0.0
    %487 = vmatpush1.msra.mxu0 0.0
    %488 = vmatprep.subr.mxu0 0.0
    %489 = vmatpush1.msra.mxu0 0.0
    %490 = vmatprep.subr.mxu0 0.0
    %491 = vmatpush1.msra.mxu0 0.0
    %492 = vmatprep.subr.mxu0 0.0
    %493 = vmatpush1.msra.mxu0 0.0
    %494 = vmatprep.subr.mxu0 0.0
    %495 = vmatpush1.msra.mxu0 0.0
    %496 = vmatprep.subr.mxu0 0.0
    %497 = vmatpush1.msra.mxu0 0.0
    %498 = vmatprep.subr.mxu0 0.0
    %499 = vmatpush1.msra.mxu0 0.0
    %500 = vmatprep.subr.mxu0 0.0
    %501 = vmatpush1.msra.mxu0 0.0
    %502 = vmatprep.subr.mxu0 0.0
    %503 = vmatpush1.msra.mxu0 0.0
    %504 = vmatprep.subr.mxu0 0.0
    %505 = vmatpush1.msra.mxu0 0.0
    %506 = vmatprep.subr.mxu0 0.0
    %507 = vmatpush1.msra.mxu0 0.0
    %508 = vmatprep.subr.mxu0 0.0
    %509 = vmatpush1.msra.mxu0 0.0
    %510 = vmatprep.subr.mxu0 0.0
    %511 = vmatpush1.msra.mxu0 0.0
    %512 = vmatprep.subr.mxu0 0.0
    %513 = vmatpush1.msra.mxu0 0.0
    %514 = vmatprep.subr.mxu0 0.0
    %515 = vmatpush1.msra.mxu0 0.0
    %516 = vmatprep.subr.mxu0 0.0
    %517 = vmatpush1.msra.mxu0 0.0
    %518 = vmatprep.mubr.f32.mxu0 0.0
    %v519 = vand.u32 %v68, 4294901760
    %v520 = vsub.f32 %v68, %v519
    %v521 = vand.u32 %v520, 4294901760
    %522 = vmatmul.mubr.f32.gmra.mrb[0].mxu0 %v521
    %v523 = vpop.f32.mrb[0].mxu0
    %v524 = vadd.f32 %v435, %v523
    %v525 = vpop.f32.mrb[0].mxu0
    %526 = vdwg.mxu0
    %527 = vmatprep.subr.mxu0 0.0
    %v528 = vand.u32 %v69, 4294901760
    %v529 = vsub.f32 %v69, %v528
    %v530 = vand.u32 %v529, 4294901760
    %531 = vmatpush1.msra.mxu0 %v530
    %532 = vmatprep.subr.mxu0 0.0
    %v533 = vand.u32 %v70, 4294901760
    %v534 = vsub.f32 %v70, %v533
    %v535 = vand.u32 %v534, 4294901760
    %536 = vmatpush1.msra.mxu0 %v535
    %537 = vmatprep.subr.mxu0 0.0
    %v538 = vand.u32 %v71, 4294901760
    %v539 = vsub.f32 %v71, %v538
    %v540 = vand.u32 %v539, 4294901760
    %541 = vmatpush1.msra.mxu0 %v540
    %542 = vmatprep.subr.mxu0 0.0
    %v543 = vand.u32 %v72, 4294901760
    %v544 = vsub.f32 %v72, %v543
    %v545 = vand.u32 %v544, 4294901760
    %546 = vmatpush1.msra.mxu0 %v545
    %547 = vmatprep.subr.mxu0 0.0
    %v548 = vand.u32 %v73, 4294901760
    %v549 = vsub.f32 %v73, %v548
    %v550 = vand.u32 %v549, 4294901760
    %551 = vmatpush1.msra.mxu0 %v550
    %552 = vmatprep.subr.mxu0 0.0
    %v553 = vand.u32 %v74, 4294901760
    %v554 = vsub.f32 %v74, %v553
    %v555 = vand.u32 %v554, 4294901760
    %556 = vmatpush1.msra.mxu0 %v555
    %557 = vmatprep.subr.mxu0 0.0
    %v558 = vand.u32 %v75, 4294901760
    %v559 = vsub.f32 %v75, %v558
    %v560 = vand.u32 %v559, 4294901760
    %561 = vmatpush1.msra.mxu0 %v560
    %562 = vmatprep.subr.mxu0 0.0
    %v563 = vand.u32 %v76, 4294901760
    %v564 = vsub.f32 %v76, %v563
    %v565 = vand.u32 %v564, 4294901760
    %566 = vmatpush1.msra.mxu0 %v565
    %567 = vmatprep.subr.mxu0 0.0
    %v568 = vand.u32 %v77, 4294901760
    %v569 = vsub.f32 %v77, %v568
    %v570 = vand.u32 %v569, 4294901760
    %571 = vmatpush1.msra.mxu0 %v570
    %572 = vmatprep.subr.mxu0 0.0
    %v573 = vand.u32 %v78, 4294901760
    %v574 = vsub.f32 %v78, %v573
    %v575 = vand.u32 %v574, 4294901760
    %576 = vmatpush1.msra.mxu0 %v575
    %577 = vmatprep.subr.mxu0 0.0
    %v578 = vand.u32 %v79, 4294901760
    %v579 = vsub.f32 %v79, %v578
    %v580 = vand.u32 %v579, 4294901760
    %581 = vmatpush1.msra.mxu0 %v580
    %582 = vmatprep.subr.mxu0 0.0
    %v583 = vand.u32 %v80, 4294901760
    %v584 = vsub.f32 %v80, %v583
    %v585 = vand.u32 %v584, 4294901760
    %586 = vmatpush1.msra.mxu0 %v585
    %587 = vmatprep.subr.mxu0 0.0
    %v588 = vand.u32 %v81, 4294901760
    %v589 = vsub.f32 %v81, %v588
    %v590 = vand.u32 %v589, 4294901760
    %591 = vmatpush1.msra.mxu0 %v590
    %592 = vmatprep.subr.mxu0 0.0
    %v593 = vand.u32 %v82, 4294901760
    %v594 = vsub.f32 %v82, %v593
    %v595 = vand.u32 %v594, 4294901760
    %596 = vmatpush1.msra.mxu0 %v595
    %597 = vmatprep.subr.mxu0 0.0
    %v598 = vand.u32 %v83, 4294901760
    %v599 = vsub.f32 %v83, %v598
    %v600 = vand.u32 %v599, 4294901760
    %601 = vmatpush1.msra.mxu0 %v600
    %602 = vmatprep.subr.mxu0 0.0
    %v603 = vand.u32 %v84, 4294901760
    %v604 = vsub.f32 %v84, %v603
    %v605 = vand.u32 %v604, 4294901760
    %606 = vmatpush1.msra.mxu0 %v605
    %607 = vmatprep.subr.mxu0 0.0
    %608 = vmatpush1.msra.mxu0 0.0
    %609 = vmatprep.subr.mxu0 0.0
    %610 = vmatpush1.msra.mxu0 0.0
    %611 = vmatprep.subr.mxu0 0.0
    %612 = vmatpush1.msra.mxu0 0.0
    %613 = vmatprep.subr.mxu0 0.0
    %614 = vmatpush1.msra.mxu0 0.0
    %615 = vmatprep.subr.mxu0 0.0
    %616 = vmatpush1.msra.mxu0 0.0
    %617 = vmatprep.subr.mxu0 0.0
    %618 = vmatpush1.msra.mxu0 0.0
    %619 = vmatprep.subr.mxu0 0.0
    %620 = vmatpush1.msra.mxu0 0.0
    %621 = vmatprep.subr.mxu0 0.0
    %622 = vmatpush1.msra.mxu0 0.0
    %623 = vmatprep.subr.mxu0 0.0
    %624 = vmatpush1.msra.mxu0 0.0
    %625 = vmatprep.subr.mxu0 0.0
    %626 = vmatpush1.msra.mxu0 0.0
    %627 = vmatprep.subr.mxu0 0.0
    %628 = vmatpush1.msra.mxu0 0.0
    %629 = vmatprep.subr.mxu0 0.0
    %630 = vmatpush1.msra.mxu0 0.0
    %631 = vmatprep.subr.mxu0 0.0
    %632 = vmatpush1.msra.mxu0 0.0
    %633 = vmatprep.subr.mxu0 0.0
    %634 = vmatpush1.msra.mxu0 0.0
    %635 = vmatprep.subr.mxu0 0.0
    %636 = vmatpush1.msra.mxu0 0.0
    %637 = vmatprep.subr.mxu0 0.0
    %638 = vmatpush1.msra.mxu0 0.0
    %639 = vmatprep.mubr.f32.mxu0 0.0
    %v640 = vand.u32 %v68, 4294901760
    %641 = vmatmul.mubr.f32.gmra.mrb[0].mxu0 %v640
    %v642 = vpop.f32.mrb[0].mxu0
    %v643 = vadd.f32 %v524, %v642
    %v644 = vpop.f32.mrb[0].mxu0
    %645 = vdwg.mxu0
    %646 = vmatprep.subr.mxu0 0.0
    %v647 = vand.u32 %v69, 4294901760
    %648 = vmatpush1.msra.mxu0 %v647
    %649 = vmatprep.subr.mxu0 0.0
    %v650 = vand.u32 %v70, 4294901760
    %651 = vmatpush1.msra.mxu0 %v650
    %652 = vmatprep.subr.mxu0 0.0
    %v653 = vand.u32 %v71, 4294901760
    %654 = vmatpush1.msra.mxu0 %v653
    %655 = vmatprep.subr.mxu0 0.0
    %v656 = vand.u32 %v72, 4294901760
    %657 = vmatpush1.msra.mxu0 %v656
    %658 = vmatprep.subr.mxu0 0.0
    %v659 = vand.u32 %v73, 4294901760
    %660 = vmatpush1.msra.mxu0 %v659
    %661 = vmatprep.subr.mxu0 0.0
    %v662 = vand.u32 %v74, 4294901760
    %663 = vmatpush1.msra.mxu0 %v662
    %664 = vmatprep.subr.mxu0 0.0
    %v665 = vand.u32 %v75, 4294901760
    %666 = vmatpush1.msra.mxu0 %v665
    %667 = vmatprep.subr.mxu0 0.0
    %v668 = vand.u32 %v76, 4294901760
    %669 = vmatpush1.msra.mxu0 %v668
    %670 = vmatprep.subr.mxu0 0.0
    %v671 = vand.u32 %v77, 4294901760
    %672 = vmatpush1.msra.mxu0 %v671
    %673 = vmatprep.subr.mxu0 0.0
    %v674 = vand.u32 %v78, 4294901760
    %675 = vmatpush1.msra.mxu0 %v674
    %676 = vmatprep.subr.mxu0 0.0
    %v677 = vand.u32 %v79, 4294901760
    %678 = vmatpush1.msra.mxu0 %v677
    %679 = vmatprep.subr.mxu0 0.0
    %v680 = vand.u32 %v80, 4294901760
    %681 = vmatpush1.msra.mxu0 %v680
    %682 = vmatprep.subr.mxu0 0.0
    %v683 = vand.u32 %v81, 4294901760
    %684 = vmatpush1.msra.mxu0 %v683
    %685 = vmatprep.subr.mxu0 0.0
    %v686 = vand.u32 %v82, 4294901760
    %687 = vmatpush1.msra.mxu0 %v686
    %688 = vmatprep.subr.mxu0 0.0
    %v689 = vand.u32 %v83, 4294901760
    %690 = vmatpush1.msra.mxu0 %v689
    %691 = vmatprep.subr.mxu0 0.0
    %v692 = vand.u32 %v84, 4294901760
    %693 = vmatpush1.msra.mxu0 %v692
    %694 = vmatprep.subr.mxu0 0.0
    %695 = vmatpush1.msra.mxu0 0.0
    %696 = vmatprep.subr.mxu0 0.0
    %697 = vmatpush1.msra.mxu0 0.0
    %698 = vmatprep.subr.mxu0 0.0
    %699 = vmatpush1.msra.mxu0 0.0
    %700 = vmatprep.subr.mxu0 0.0
    %701 = vmatpush1.msra.mxu0 0.0
    %702 = vmatprep.subr.mxu0 0.0
    %703 = vmatpush1.msra.mxu0 0.0
    %704 = vmatprep.subr.mxu0 0.0
    %705 = vmatpush1.msra.mxu0 0.0
    %706 = vmatprep.subr.mxu0 0.0
    %707 = vmatpush1.msra.mxu0 0.0
    %708 = vmatprep.subr.mxu0 0.0
    %709 = vmatpush1.msra.mxu0 0.0
    %710 = vmatprep.subr.mxu0 0.0
    %711 = vmatpush1.msra.mxu0 0.0
    %712 = vmatprep.subr.mxu0 0.0
    %713 = vmatpush1.msra.mxu0 0.0
    %714 = vmatprep.subr.mxu0 0.0
    %715 = vmatpush1.msra.mxu0 0.0
    %716 = vmatprep.subr.mxu0 0.0
    %717 = vmatpush1.msra.mxu0 0.0
    %718 = vmatprep.subr.mxu0 0.0
    %719 = vmatpush1.msra.mxu0 0.0
    %720 = vmatprep.subr.mxu0 0.0
    %721 = vmatpush1.msra.mxu0 0.0
    %722 = vmatprep.subr.mxu0 0.0
    %723 = vmatpush1.msra.mxu0 0.0
    %724 = vmatprep.subr.mxu0 0.0
    %725 = vmatpush1.msra.mxu0 0.0
    %726 = vmatprep.mubr.f32.mxu0 0.0
    %v727 = vand.u32 %v68, 4294901760
    %728 = vmatmul.mubr.f32.gmra.mrb[0].mxu0 %v727
    %v729 = vpop.f32.mrb[0].mxu0
    %v730 = vadd.f32 %v643, %v729
    %v731 = vpop.f32.mrb[0].mxu0
    %732 = vdwg.mxu0
    %v733 = vmax.f32 %v730, 0.0
    %v734 = vld [vmem:[#allocation5] sm:$0xff]
    %v735 = vld [vmem:[#allocation5 + $0x8] sm:$0xff]
    %v736 = vld [vmem:[#allocation5 + $0x10] sm:$0xff]
    %v737 = vld [vmem:[#allocation5 + $0x18] sm:$0xff]
    %v738 = vld [vmem:[#allocation5 + $0x20] sm:$0xff]
    %v739 = vld [vmem:[#allocation5 + $0x28] sm:$0xff]
    %v740 = vld [vmem:[#allocation5 + $0x30] sm:$0xff]
    %v741 = vld [vmem:[#allocation5 + $0x38] sm:$0xff]
    %v742 = vld [vmem:[#allocation5 + $0x40] sm:$0xff]
    %v743 = vld [vmem:[#allocation5 + $0x48] sm:$0xff]
    %v744 = vld [vmem:[#allocation5 + $0x50] sm:$0xff]
    %v745 = vld [vmem:[#allocation5 + $0x58] sm:$0xff]
    %v746 = vld [vmem:[#allocation5 + $0x60] sm:$0xff]
    %v747 = vld [vmem:[#allocation5 + $0x68] sm:$0xff]
    %v748 = vld [vmem:[#allocation5 + $0x70] sm:$0xff]
    %v749 = vld [vmem:[#allocation5 + $0x78] sm:$0xff]
    %v750 = vld [vmem:[%s4] sm:$0x1]
    %v752 = vlaneseq
    %v753 = vshrl.u32 %v752, 7
    %v754 = vsub.s32 0, %v753
    %v755 = vrot.slane %v750, %v754
    %757 = vmatprep.subr.mxu0 0.0
    %v758 = vand.u32 %v734, 4294901760
    %759 = vmatpush1.msra.mxu0 %v758
    %760 = vmatprep.subr.mxu0 0.0
    %v761 = vand.u32 %v735, 4294901760
    %762 = vmatpush1.msra.mxu0 %v761
    %763 = vmatprep.subr.mxu0 0.0
    %v764 = vand.u32 %v736, 4294901760
    %765 = vmatpush1.msra.mxu0 %v764
    %766 = vmatprep.subr.mxu0 0.0
    %v767 = vand.u32 %v737, 4294901760
    %768 = vmatpush1.msra.mxu0 %v767
    %769 = vmatprep.subr.mxu0 0.0
    %v770 = vand.u32 %v738, 4294901760
    %771 = vmatpush1.msra.mxu0 %v770
    %772 = vmatprep.subr.mxu0 0.0
    %v773 = vand.u32 %v739, 4294901760
    %774 = vmatpush1.msra.mxu0 %v773
    %775 = vmatprep.subr.mxu0 0.0
    %v776 = vand.u32 %v740, 4294901760
    %777 = vmatpush1.msra.mxu0 %v776
    %778 = vmatprep.subr.mxu0 0.0
    %v779 = vand.u32 %v741, 4294901760
    %780 = vmatpush1.msra.mxu0 %v779
    %781 = vmatprep.subr.mxu0 0.0
    %v782 = vand.u32 %v742, 4294901760
    %783 = vmatpush1.msra.mxu0 %v782
    %784 = vmatprep.subr.mxu0 0.0
    %v785 = vand.u32 %v743, 4294901760
    %786 = vmatpush1.msra.mxu0 %v785
    %787 = vmatprep.subr.mxu0 0.0
    %v788 = vand.u32 %v744, 4294901760
    %789 = vmatpush1.msra.mxu0 %v788
    %790 = vmatprep.subr.mxu0 0.0
    %v791 = vand.u32 %v745, 4294901760
    %792 = vmatpush1.msra.mxu0 %v791
    %793 = vmatprep.subr.mxu0 0.0
    %v794 = vand.u32 %v746, 4294901760
    %795 = vmatpush1.msra.mxu0 %v794
    %796 = vmatprep.subr.mxu0 0.0
    %v797 = vand.u32 %v747, 4294901760
    %798 = vmatpush1.msra.mxu0 %v797
    %799 = vmatprep.subr.mxu0 0.0
    %v800 = vand.u32 %v748, 4294901760
    %801 = vmatpush1.msra.mxu0 %v800
    %802 = vmatprep.subr.mxu0 0.0
    %v803 = vand.u32 %v749, 4294901760
    %804 = vmatpush1.msra.mxu0 %v803
    %805 = vmatprep.subr.mxu0 0.0
    %806 = vmatpush1.msra.mxu0 0.0
    %807 = vmatprep.subr.mxu0 0.0
    %808 = vmatpush1.msra.mxu0 0.0
    %809 = vmatprep.subr.mxu0 0.0
    %810 = vmatpush1.msra.mxu0 0.0
    %811 = vmatprep.subr.mxu0 0.0
    %812 = vmatpush1.msra.mxu0 0.0
    %813 = vmatprep.subr.mxu0 0.0
    %814 = vmatpush1.msra.mxu0 0.0
    %815 = vmatprep.subr.mxu0 0.0
    %816 = vmatpush1.msra.mxu0 0.0
    %817 = vmatprep.subr.mxu0 0.0
    %818 = vmatpush1.msra.mxu0 0.0
    %819 = vmatprep.subr.mxu0 0.0
    %820 = vmatpush1.msra.mxu0 0.0
    %821 = vmatprep.subr.mxu0 0.0
    %822 = vmatpush1.msra.mxu0 0.0
    %823 = vmatprep.subr.mxu0 0.0
    %824 = vmatpush1.msra.mxu0 0.0
    %825 = vmatprep.subr.mxu0 0.0
    %826 = vmatpush1.msra.mxu0 0.0
    %827 = vmatprep.subr.mxu0 0.0
    %828 = vmatpush1.msra.mxu0 0.0
    %829 = vmatprep.subr.mxu0 0.0
    %830 = vmatpush1.msra.mxu0 0.0
    %831 = vmatprep.subr.mxu0 0.0
    %832 = vmatpush1.msra.mxu0 0.0
    %833 = vmatprep.subr.mxu0 0.0
    %834 = vmatpush1.msra.mxu0 0.0
    %835 = vmatprep.subr.mxu0 0.0
    %836 = vmatpush1.msra.mxu0 0.0
    %837 = vmatprep.mubr.f32.mxu0 0.0
    %v838 = vand.u32 %v733, 4294901760
    %v839 = vsub.f32 %v733, %v838
    %v840 = vand.u32 %v839, 4294901760
    %v841 = vsub.f32 %v839, %v840
    %v842 = vand.u32 %v841, 4294901760
    %843 = vmatmul.mubr.f32.gmra.mrb[0].mxu0 %v842
    %v844 = vpop.f32.mrb[0].mxu0
    %v845 = vadd.f32 %v755, %v844
    %v846 = vpop.f32.mrb[0].mxu0
    %847 = vdwg.mxu0
    %848 = vmatprep.subr.mxu0 0.0
    %v849 = vand.u32 %v734, 4294901760
    %v850 = vsub.f32 %v734, %v849
    %v851 = vand.u32 %v850, 4294901760
    %v852 = vsub.f32 %v850, %v851
    %v853 = vand.u32 %v852, 4294901760
    %854 = vmatpush1.msra.mxu0 %v853
    %855 = vmatprep.subr.mxu0 0.0
    %v856 = vand.u32 %v735, 4294901760
    %v857 = vsub.f32 %v735, %v856
    %v858 = vand.u32 %v857, 4294901760
    %v859 = vsub.f32 %v857, %v858
    %v860 = vand.u32 %v859, 4294901760
    %861 = vmatpush1.msra.mxu0 %v860
    %862 = vmatprep.subr.mxu0 0.0
    %v863 = vand.u32 %v736, 4294901760
    %v864 = vsub.f32 %v736, %v863
    %v865 = vand.u32 %v864, 4294901760
    %v866 = vsub.f32 %v864, %v865
    %v867 = vand.u32 %v866, 4294901760
    %868 = vmatpush1.msra.mxu0 %v867
    %869 = vmatprep.subr.mxu0 0.0
    %v870 = vand.u32 %v737, 4294901760
    %v871 = vsub.f32 %v737, %v870
    %v872 = vand.u32 %v871, 4294901760
    %v873 = vsub.f32 %v871, %v872
    %v874 = vand.u32 %v873, 4294901760
    %875 = vmatpush1.msra.mxu0 %v874
    %876 = vmatprep.subr.mxu0 0.0
    %v877 = vand.u32 %v738, 4294901760
    %v878 = vsub.f32 %v738, %v877
    %v879 = vand.u32 %v878, 4294901760
    %v880 = vsub.f32 %v878, %v879
    %v881 = vand.u32 %v880, 4294901760
    %882 = vmatpush1.msra.mxu0 %v881
    %883 = vmatprep.subr.mxu0 0.0
    %v884 = vand.u32 %v739, 4294901760
    %v885 = vsub.f32 %v739, %v884
    %v886 = vand.u32 %v885, 4294901760
    %v887 = vsub.f32 %v885, %v886
    %v888 = vand.u32 %v887, 4294901760
    %889 = vmatpush1.msra.mxu0 %v888
    %890 = vmatprep.subr.mxu0 0.0
    %v891 = vand.u32 %v740, 4294901760
    %v892 = vsub.f32 %v740, %v891
    %v893 = vand.u32 %v892, 4294901760
    %v894 = vsub.f32 %v892, %v893
    %v895 = vand.u32 %v894, 4294901760
    %896 = vmatpush1.msra.mxu0 %v895
    %897 = vmatprep.subr.mxu0 0.0
    %v898 = vand.u32 %v741, 4294901760
    %v899 = vsub.f32 %v741, %v898
    %v900 = vand.u32 %v899, 4294901760
    %v901 = vsub.f32 %v899, %v900
    %v902 = vand.u32 %v901, 4294901760
    %903 = vmatpush1.msra.mxu0 %v902
    %904 = vmatprep.subr.mxu0 0.0
    %v905 = vand.u32 %v742, 4294901760
    %v906 = vsub.f32 %v742, %v905
    %v907 = vand.u32 %v906, 4294901760
    %v908 = vsub.f32 %v906, %v907
    %v909 = vand.u32 %v908, 4294901760
    %910 = vmatpush1.msra.mxu0 %v909
    %911 = vmatprep.subr.mxu0 0.0
    %v912 = vand.u32 %v743, 4294901760
    %v913 = vsub.f32 %v743, %v912
    %v914 = vand.u32 %v913, 4294901760
    %v915 = vsub.f32 %v913, %v914
    %v916 = vand.u32 %v915, 4294901760
    %917 = vmatpush1.msra.mxu0 %v916
    %918 = vmatprep.subr.mxu0 0.0
    %v919 = vand.u32 %v744, 4294901760
    %v920 = vsub.f32 %v744, %v919
    %v921 = vand.u32 %v920, 4294901760
    %v922 = vsub.f32 %v920, %v921
    %v923 = vand.u32 %v922, 4294901760
    %924 = vmatpush1.msra.mxu0 %v923
    %925 = vmatprep.subr.mxu0 0.0
    %v926 = vand.u32 %v745, 4294901760
    %v927 = vsub.f32 %v745, %v926
    %v928 = vand.u32 %v927, 4294901760
    %v929 = vsub.f32 %v927, %v928
    %v930 = vand.u32 %v929, 4294901760
    %931 = vmatpush1.msra.mxu0 %v930
    %932 = vmatprep.subr.mxu0 0.0
    %v933 = vand.u32 %v746, 4294901760
    %v934 = vsub.f32 %v746, %v933
    %v935 = vand.u32 %v934, 4294901760
    %v936 = vsub.f32 %v934, %v935
    %v937 = vand.u32 %v936, 4294901760
    %938 = vmatpush1.msra.mxu0 %v937
    %939 = vmatprep.subr.mxu0 0.0
    %v940 = vand.u32 %v747, 4294901760
    %v941 = vsub.f32 %v747, %v940
    %v942 = vand.u32 %v941, 4294901760
    %v943 = vsub.f32 %v941, %v942
    %v944 = vand.u32 %v943, 4294901760
    %945 = vmatpush1.msra.mxu0 %v944
    %946 = vmatprep.subr.mxu0 0.0
    %v947 = vand.u32 %v748, 4294901760
    %v948 = vsub.f32 %v748, %v947
    %v949 = vand.u32 %v948, 4294901760
    %v950 = vsub.f32 %v948, %v949
    %v951 = vand.u32 %v950, 4294901760
    %952 = vmatpush1.msra.mxu0 %v951
    %953 = vmatprep.subr.mxu0 0.0
    %v954 = vand.u32 %v749, 4294901760
    %v955 = vsub.f32 %v749, %v954
    %v956 = vand.u32 %v955, 4294901760
    %v957 = vsub.f32 %v955, %v956
    %v958 = vand.u32 %v957, 4294901760
    %959 = vmatpush1.msra.mxu0 %v958
    %960 = vmatprep.subr.mxu0 0.0
    %961 = vmatpush1.msra.mxu0 0.0
    %962 = vmatprep.subr.mxu0 0.0
    %963 = vmatpush1.msra.mxu0 0.0
    %964 = vmatprep.subr.mxu0 0.0
    %965 = vmatpush1.msra.mxu0 0.0
    %966 = vmatprep.subr.mxu0 0.0
    %967 = vmatpush1.msra.mxu0 0.0
    %968 = vmatprep.subr.mxu0 0.0
    %969 = vmatpush1.msra.mxu0 0.0
    %970 = vmatprep.subr.mxu0 0.0
    %971 = vmatpush1.msra.mxu0 0.0
    %972 = vmatprep.subr.mxu0 0.0
    %973 = vmatpush1.msra.mxu0 0.0
    %974 = vmatprep.subr.mxu0 0.0
    %975 = vmatpush1.msra.mxu0 0.0
    %976 = vmatprep.subr.mxu0 0.0
    %977 = vmatpush1.msra.mxu0 0.0
    %978 = vmatprep.subr.mxu0 0.0
    %979 = vmatpush1.msra.mxu0 0.0
    %980 = vmatprep.subr.mxu0 0.0
    %981 = vmatpush1.msra.mxu0 0.0
    %982 = vmatprep.subr.mxu0 0.0
    %983 = vmatpush1.msra.mxu0 0.0
    %984 = vmatprep.subr.mxu0 0.0
    %985 = vmatpush1.msra.mxu0 0.0
    %986 = vmatprep.subr.mxu0 0.0
    %987 = vmatpush1.msra.mxu0 0.0
    %988 = vmatprep.subr.mxu0 0.0
    %989 = vmatpush1.msra.mxu0 0.0
    %990 = vmatprep.subr.mxu0 0.0
    %991 = vmatpush1.msra.mxu0 0.0
    %992 = vmatprep.mubr.f32.mxu0 0.0
    %v993 = vand.u32 %v733, 4294901760
    %994 = vmatmul.mubr.f32.gmra.mrb[0].mxu0 %v993
    %v995 = vpop.f32.mrb[0].mxu0
    %v996 = vadd.f32 %v845, %v995
    %v997 = vpop.f32.mrb[0].mxu0
    %998 = vdwg.mxu0
    %999 = vmatprep.subr.mxu0 0.0
    %v1000 = vand.u32 %v734, 4294901760
    %v1001 = vsub.f32 %v734, %v1000
    %1002 = vmatpush1.msra.mxu0 %v1001
    %1003 = vmatprep.subr.mxu0 0.0
    %v1004 = vand.u32 %v735, 4294901760
    %v1005 = vsub.f32 %v735, %v1004
    %1006 = vmatpush1.msra.mxu0 %v1005
    %1007 = vmatprep.subr.mxu0 0.0
    %v1008 = vand.u32 %v736, 4294901760
    %v1009 = vsub.f32 %v736, %v1008
    %1010 = vmatpush1.msra.mxu0 %v1009
    %1011 = vmatprep.subr.mxu0 0.0
    %v1012 = vand.u32 %v737, 4294901760
    %v1013 = vsub.f32 %v737, %v1012
    %1014 = vmatpush1.msra.mxu0 %v1013
    %1015 = vmatprep.subr.mxu0 0.0
    %v1016 = vand.u32 %v738, 4294901760
    %v1017 = vsub.f32 %v738, %v1016
    %1018 = vmatpush1.msra.mxu0 %v1017
    %1019 = vmatprep.subr.mxu0 0.0
    %v1020 = vand.u32 %v739, 4294901760
    %v1021 = vsub.f32 %v739, %v1020
    %1022 = vmatpush1.msra.mxu0 %v1021
    %1023 = vmatprep.subr.mxu0 0.0
    %v1024 = vand.u32 %v740, 4294901760
    %v1025 = vsub.f32 %v740, %v1024
    %1026 = vmatpush1.msra.mxu0 %v1025
    %1027 = vmatprep.subr.mxu0 0.0
    %v1028 = vand.u32 %v741, 4294901760
    %v1029 = vsub.f32 %v741, %v1028
    %1030 = vmatpush1.msra.mxu0 %v1029
    %1031 = vmatprep.subr.mxu0 0.0
    %v1032 = vand.u32 %v742, 4294901760
    %v1033 = vsub.f32 %v742, %v1032
    %1034 = vmatpush1.msra.mxu0 %v1033
    %1035 = vmatprep.subr.mxu0 0.0
    %v1036 = vand.u32 %v743, 4294901760
    %v1037 = vsub.f32 %v743, %v1036
    %1038 = vmatpush1.msra.mxu0 %v1037
    %1039 = vmatprep.subr.mxu0 0.0
    %v1040 = vand.u32 %v744, 4294901760
    %v1041 = vsub.f32 %v744, %v1040
    %1042 = vmatpush1.msra.mxu0 %v1041
    %1043 = vmatprep.subr.mxu0 0.0
    %v1044 = vand.u32 %v745, 4294901760
    %v1045 = vsub.f32 %v745, %v1044
    %1046 = vmatpush1.msra.mxu0 %v1045
    %1047 = vmatprep.subr.mxu0 0.0
    %v1048 = vand.u32 %v746, 4294901760
    %v1049 = vsub.f32 %v746, %v1048
    %1050 = vmatpush1.msra.mxu0 %v1049
    %1051 = vmatprep.subr.mxu0 0.0
    %v1052 = vand.u32 %v747, 4294901760
    %v1053 = vsub.f32 %v747, %v1052
    %1054 = vmatpush1.msra.mxu0 %v1053
    %1055 = vmatprep.subr.mxu0 0.0
    %v1056 = vand.u32 %v748, 4294901760
    %v1057 = vsub.f32 %v748, %v1056
    %1058 = vmatpush1.msra.mxu0 %v1057
    %1059 = vmatprep.subr.mxu0 0.0
    %v1060 = vand.u32 %v749, 4294901760
    %v1061 = vsub.f32 %v749, %v1060
    %1062 = vmatpush1.msra.mxu0 %v1061
    %1063 = vmatprep.subr.mxu0 0.0
    %1064 = vmatpush1.msra.mxu0 0.0
    %1065 = vmatprep.subr.mxu0 0.0
    %1066 = vmatpush1.msra.mxu0 0.0
    %1067 = vmatprep.subr.mxu0 0.0
    %1068 = vmatpush1.msra.mxu0 0.0
    %1069 = vmatprep.subr.mxu0 0.0
    %1070 = vmatpush1.msra.mxu0 0.0
    %1071 = vmatprep.subr.mxu0 0.0
    %1072 = vmatpush1.msra.mxu0 0.0
    %1073 = vmatprep.subr.mxu0 0.0
    %1074 = vmatpush1.msra.mxu0 0.0
    %1075 = vmatprep.subr.mxu0 0.0
    %1076 = vmatpush1.msra.mxu0 0.0
    %1077 = vmatprep.subr.mxu0 0.0
    %1078 = vmatpush1.msra.mxu0 0.0
    %1079 = vmatprep.subr.mxu0 0.0
    %1080 = vmatpush1.msra.mxu0 0.0
    %1081 = vmatprep.subr.mxu0 0.0
    %1082 = vmatpush1.msra.mxu0 0.0
    %1083 = vmatprep.subr.mxu0 0.0
    %1084 = vmatpush1.msra.mxu0 0.0
    %1085 = vmatprep.subr.mxu0 0.0
    %1086 = vmatpush1.msra.mxu0 0.0
    %1087 = vmatprep.subr.mxu0 0.0
    %1088 = vmatpush1.msra.mxu0 0.0
    %1089 = vmatprep.subr.mxu0 0.0
    %1090 = vmatpush1.msra.mxu0 0.0
    %1091 = vmatprep.subr.mxu0 0.0
    %1092 = vmatpush1.msra.mxu0 0.0
    %1093 = vmatprep.subr.mxu0 0.0
    %1094 = vmatpush1.msra.mxu0 0.0
    %1095 = vmatprep.mubr.f32.mxu0 0.0
    %v1096 = vand.u32 %v733, 4294901760
    %v1097 = vsub.f32 %v733, %v1096
    %1098 = vmatmul.mubr.f32.gmra.mrb[0].mxu0 %v1097
    %v1099 = vpop.f32.mrb[0].mxu0
    %v1100 = vadd.f32 %v996, %v1099
    %v1101 = vpop.f32.mrb[0].mxu0
    %1102 = vdwg.mxu0
    %1103 = vmatprep.subr.mxu0 0.0
    %v1104 = vand.u32 %v734, 4294901760
    %1105 = vmatpush1.msra.mxu0 %v1104
    %1106 = vmatprep.subr.mxu0 0.0
    %v1107 = vand.u32 %v735, 4294901760
    %1108 = vmatpush1.msra.mxu0 %v1107
    %1109 = vmatprep.subr.mxu0 0.0
    %v1110 = vand.u32 %v736, 4294901760
    %1111 = vmatpush1.msra.mxu0 %v1110
    %1112 = vmatprep.subr.mxu0 0.0
    %v1113 = vand.u32 %v737, 4294901760
    %1114 = vmatpush1.msra.mxu0 %v1113
    %1115 = vmatprep.subr.mxu0 0.0
    %v1116 = vand.u32 %v738, 4294901760
    %1117 = vmatpush1.msra.mxu0 %v1116
    %1118 = vmatprep.subr.mxu0 0.0
    %v1119 = vand.u32 %v739, 4294901760
    %1120 = vmatpush1.msra.mxu0 %v1119
    %1121 = vmatprep.subr.mxu0 0.0
    %v1122 = vand.u32 %v740, 4294901760
    %1123 = vmatpush1.msra.mxu0 %v1122
    %1124 = vmatprep.subr.mxu0 0.0
    %v1125 = vand.u32 %v741, 4294901760
    %1126 = vmatpush1.msra.mxu0 %v1125
    %1127 = vmatprep.subr.mxu0 0.0
    %v1128 = vand.u32 %v742, 4294901760
    %1129 = vmatpush1.msra.mxu0 %v1128
    %1130 = vmatprep.subr.mxu0 0.0
    %v1131 = vand.u32 %v743, 4294901760
    %1132 = vmatpush1.msra.mxu0 %v1131
    %1133 = vmatprep.subr.mxu0 0.0
    %v1134 = vand.u32 %v744, 4294901760
    %1135 = vmatpush1.msra.mxu0 %v1134
    %1136 = vmatprep.subr.mxu0 0.0
    %v1137 = vand.u32 %v745, 4294901760
    %1138 = vmatpush1.msra.mxu0 %v1137
    %1139 = vmatprep.subr.mxu0 0.0
    %v1140 = vand.u32 %v746, 4294901760
    %1141 = vmatpush1.msra.mxu0 %v1140
    %1142 = vmatprep.subr.mxu0 0.0
    %v1143 = vand.u32 %v747, 4294901760
    %1144 = vmatpush1.msra.mxu0 %v1143
    %1145 = vmatprep.subr.mxu0 0.0
    %v1146 = vand.u32 %v748, 4294901760
    %1147 = vmatpush1.msra.mxu0 %v1146
    %1148 = vmatprep.subr.mxu0 0.0
    %v1149 = vand.u32 %v749, 4294901760
    %1150 = vmatpush1.msra.mxu0 %v1149
    %1151 = vmatprep.subr.mxu0 0.0
    %1152 = vmatpush1.msra.mxu0 0.0
    %1153 = vmatprep.subr.mxu0 0.0
    %1154 = vmatpush1.msra.mxu0 0.0
    %1155 = vmatprep.subr.mxu0 0.0
    %1156 = vmatpush1.msra.mxu0 0.0
    %1157 = vmatprep.subr.mxu0 0.0
    %1158 = vmatpush1.msra.mxu0 0.0
    %1159 = vmatprep.subr.mxu0 0.0
    %1160 = vmatpush1.msra.mxu0 0.0
    %1161 = vmatprep.subr.mxu0 0.0
    %1162 = vmatpush1.msra.mxu0 0.0
    %1163 = vmatprep.subr.mxu0 0.0
    %1164 = vmatpush1.msra.mxu0 0.0
    %1165 = vmatprep.subr.mxu0 0.0
    %1166 = vmatpush1.msra.mxu0 0.0
    %1167 = vmatprep.subr.mxu0 0.0
    %1168 = vmatpush1.msra.mxu0 0.0
    %1169 = vmatprep.subr.mxu0 0.0
    %1170 = vmatpush1.msra.mxu0 0.0
    %1171 = vmatprep.subr.mxu0 0.0
    %1172 = vmatpush1.msra.mxu0 0.0
    %1173 = vmatprep.subr.mxu0 0.0
    %1174 = vmatpush1.msra.mxu0 0.0
    %1175 = vmatprep.subr.mxu0 0.0
    %1176 = vmatpush1.msra.mxu0 0.0
    %1177 = vmatprep.subr.mxu0 0.0
    %1178 = vmatpush1.msra.mxu0 0.0
    %1179 = vmatprep.subr.mxu0 0.0
    %1180 = vmatpush1.msra.mxu0 0.0
    %1181 = vmatprep.subr.mxu0 0.0
    %1182 = vmatpush1.msra.mxu0 0.0
    %1183 = vmatprep.mubr.f32.mxu0 0.0
    %v1184 = vand.u32 %v733, 4294901760
    %v1185 = vsub.f32 %v733, %v1184
    %v1186 = vand.u32 %v1185, 4294901760
    %1187 = vmatmul.mubr.f32.gmra.mrb[0].mxu0 %v1186
    %v1188 = vpop.f32.mrb[0].mxu0
    %v1189 = vadd.f32 %v1100, %v1188
    %v1190 = vpop.f32.mrb[0].mxu0
    %1191 = vdwg.mxu0
    %1192 = vmatprep.subr.mxu0 0.0
    %v1193 = vand.u32 %v734, 4294901760
    %v1194 = vsub.f32 %v734, %v1193
    %v1195 = vand.u32 %v1194, 4294901760
    %1196 = vmatpush1.msra.mxu0 %v1195
    %1197 = vmatprep.subr.mxu0 0.0
    %v1198 = vand.u32 %v735, 4294901760
    %v1199 = vsub.f32 %v735, %v1198
    %v1200 = vand.u32 %v1199, 4294901760
    %1201 = vmatpush1.msra.mxu0 %v1200
    %1202 = vmatprep.subr.mxu0 0.0
    %v1203 = vand.u32 %v736, 4294901760
    %v1204 = vsub.f32 %v736, %v1203
    %v1205 = vand.u32 %v1204, 4294901760
    %1206 = vmatpush1.msra.mxu0 %v1205
    %1207 = vmatprep.subr.mxu0 0.0
    %v1208 = vand.u32 %v737, 4294901760
    %v1209 = vsub.f32 %v737, %v1208
    %v1210 = vand.u32 %v1209, 4294901760
    %1211 = vmatpush1.msra.mxu0 %v1210
    %1212 = vmatprep.subr.mxu0 0.0
    %v1213 = vand.u32 %v738, 4294901760
    %v1214 = vsub.f32 %v738, %v1213
    %v1215 = vand.u32 %v1214, 4294901760
    %1216 = vmatpush1.msra.mxu0 %v1215
    %1217 = vmatprep.subr.mxu0 0.0
    %v1218 = vand.u32 %v739, 4294901760
    %v1219 = vsub.f32 %v739, %v1218
    %v1220 = vand.u32 %v1219, 4294901760
    %1221 = vmatpush1.msra.mxu0 %v1220
    %1222 = vmatprep.subr.mxu0 0.0
    %v1223 = vand.u32 %v740, 4294901760
    %v1224 = vsub.f32 %v740, %v1223
    %v1225 = vand.u32 %v1224, 4294901760
    %1226 = vmatpush1.msra.mxu0 %v1225
    %1227 = vmatprep.subr.mxu0 0.0
    %v1228 = vand.u32 %v741, 4294901760
    %v1229 = vsub.f32 %v741, %v1228
    %v1230 = vand.u32 %v1229, 4294901760
    %1231 = vmatpush1.msra.mxu0 %v1230
    %1232 = vmatprep.subr.mxu0 0.0
    %v1233 = vand.u32 %v742, 4294901760
    %v1234 = vsub.f32 %v742, %v1233
    %v1235 = vand.u32 %v1234, 4294901760
    %1236 = vmatpush1.msra.mxu0 %v1235
    %1237 = vmatprep.subr.mxu0 0.0
    %v1238 = vand.u32 %v743, 4294901760
    %v1239 = vsub.f32 %v743, %v1238
    %v1240 = vand.u32 %v1239, 4294901760
    %1241 = vmatpush1.msra.mxu0 %v1240
    %1242 = vmatprep.subr.mxu0 0.0
    %v1243 = vand.u32 %v744, 4294901760
    %v1244 = vsub.f32 %v744, %v1243
    %v1245 = vand.u32 %v1244, 4294901760
    %1246 = vmatpush1.msra.mxu0 %v1245
    %1247 = vmatprep.subr.mxu0 0.0
    %v1248 = vand.u32 %v745, 4294901760
    %v1249 = vsub.f32 %v745, %v1248
    %v1250 = vand.u32 %v1249, 4294901760
    %1251 = vmatpush1.msra.mxu0 %v1250
    %1252 = vmatprep.subr.mxu0 0.0
    %v1253 = vand.u32 %v746, 4294901760
    %v1254 = vsub.f32 %v746, %v1253
    %v1255 = vand.u32 %v1254, 4294901760
    %1256 = vmatpush1.msra.mxu0 %v1255
    %1257 = vmatprep.subr.mxu0 0.0
    %v1258 = vand.u32 %v747, 4294901760
    %v1259 = vsub.f32 %v747, %v1258
    %v1260 = vand.u32 %v1259, 4294901760
    %1261 = vmatpush1.msra.mxu0 %v1260
    %1262 = vmatprep.subr.mxu0 0.0
    %v1263 = vand.u32 %v748, 4294901760
    %v1264 = vsub.f32 %v748, %v1263
    %v1265 = vand.u32 %v1264, 4294901760
    %1266 = vmatpush1.msra.mxu0 %v1265
    %1267 = vmatprep.subr.mxu0 0.0
    %v1268 = vand.u32 %v749, 4294901760
    %v1269 = vsub.f32 %v749, %v1268
    %v1270 = vand.u32 %v1269, 4294901760
    %1271 = vmatpush1.msra.mxu0 %v1270
    %1272 = vmatprep.subr.mxu0 0.0
    %1273 = vmatpush1.msra.mxu0 0.0
    %1274 = vmatprep.subr.mxu0 0.0
    %1275 = vmatpush1.msra.mxu0 0.0
    %1276 = vmatprep.subr.mxu0 0.0
    %1277 = vmatpush1.msra.mxu0 0.0
    %1278 = vmatprep.subr.mxu0 0.0
    %1279 = vmatpush1.msra.mxu0 0.0
    %1280 = vmatprep.subr.mxu0 0.0
    %1281 = vmatpush1.msra.mxu0 0.0
    %1282 = vmatprep.subr.mxu0 0.0
    %1283 = vmatpush1.msra.mxu0 0.0
    %1284 = vmatprep.subr.mxu0 0.0
    %1285 = vmatpush1.msra.mxu0 0.0
    %1286 = vmatprep.subr.mxu0 0.0
    %1287 = vmatpush1.msra.mxu0 0.0
    %1288 = vmatprep.subr.mxu0 0.0
    %1289 = vmatpush1.msra.mxu0 0.0
    %1290 = vmatprep.subr.mxu0 0.0
    %1291 = vmatpush1.msra.mxu0 0.0
    %1292 = vmatprep.subr.mxu0 0.0
    %1293 = vmatpush1.msra.mxu0 0.0
    %1294 = vmatprep.subr.mxu0 0.0
    %1295 = vmatpush1.msra.mxu0 0.0
    %1296 = vmatprep.subr.mxu0 0.0
    %1297 = vmatpush1.msra.mxu0 0.0
    %1298 = vmatprep.subr.mxu0 0.0
    %1299 = vmatpush1.msra.mxu0 0.0
    %1300 = vmatprep.subr.mxu0 0.0
    %1301 = vmatpush1.msra.mxu0 0.0
    %1302 = vmatprep.subr.mxu0 0.0
    %1303 = vmatpush1.msra.mxu0 0.0
    %1304 = vmatprep.mubr.f32.mxu0 0.0
    %v1305 = vand.u32 %v733, 4294901760
    %1306 = vmatmul.mubr.f32.gmra.mrb[0].mxu0 %v1305
    %v1307 = vpop.f32.mrb[0].mxu0
    %v1308 = vadd.f32 %v1189, %v1307
    %v1309 = vpop.f32.mrb[0].mxu0
    %1310 = vdwg.mxu0
    %1311 = vmatprep.subr.mxu0 0.0
    %v1312 = vand.u32 %v734, 4294901760
    %1313 = vmatpush1.msra.mxu0 %v1312
    %1314 = vmatprep.subr.mxu0 0.0
    %v1315 = vand.u32 %v735, 4294901760
    %1316 = vmatpush1.msra.mxu0 %v1315
    %1317 = vmatprep.subr.mxu0 0.0
    %v1318 = vand.u32 %v736, 4294901760
    %1319 = vmatpush1.msra.mxu0 %v1318
    %1320 = vmatprep.subr.mxu0 0.0
    %v1321 = vand.u32 %v737, 4294901760
    %1322 = vmatpush1.msra.mxu0 %v1321
    %1323 = vmatprep.subr.mxu0 0.0
    %v1324 = vand.u32 %v738, 4294901760
    %1325 = vmatpush1.msra.mxu0 %v1324
    %1326 = vmatprep.subr.mxu0 0.0
    %v1327 = vand.u32 %v739, 4294901760
    %1328 = vmatpush1.msra.mxu0 %v1327
    %1329 = vmatprep.subr.mxu0 0.0
    %v1330 = vand.u32 %v740, 4294901760
    %1331 = vmatpush1.msra.mxu0 %v1330
    %1332 = vmatprep.subr.mxu0 0.0
    %v1333 = vand.u32 %v741, 4294901760
    %1334 = vmatpush1.msra.mxu0 %v1333
    %1335 = vmatprep.subr.mxu0 0.0
    %v1336 = vand.u32 %v742, 4294901760
    %1337 = vmatpush1.msra.mxu0 %v1336
    %1338 = vmatprep.subr.mxu0 0.0
    %v1339 = vand.u32 %v743, 4294901760
    %1340 = vmatpush1.msra.mxu0 %v1339
    %1341 = vmatprep.subr.mxu0 0.0
    %v1342 = vand.u32 %v744, 4294901760
    %1343 = vmatpush1.msra.mxu0 %v1342
    %1344 = vmatprep.subr.mxu0 0.0
    %v1345 = vand.u32 %v745, 4294901760
    %1346 = vmatpush1.msra.mxu0 %v1345
    %1347 = vmatprep.subr.mxu0 0.0
    %v1348 = vand.u32 %v746, 4294901760
    %1349 = vmatpush1.msra.mxu0 %v1348
    %1350 = vmatprep.subr.mxu0 0.0
    %v1351 = vand.u32 %v747, 4294901760
    %1352 = vmatpush1.msra.mxu0 %v1351
    %1353 = vmatprep.subr.mxu0 0.0
    %v1354 = vand.u32 %v748, 4294901760
    %1355 = vmatpush1.msra.mxu0 %v1354
    %1356 = vmatprep.subr.mxu0 0.0
    %v1357 = vand.u32 %v749, 4294901760
    %1358 = vmatpush1.msra.mxu0 %v1357
    %1359 = vmatprep.subr.mxu0 0.0
    %1360 = vmatpush1.msra.mxu0 0.0
    %1361 = vmatprep.subr.mxu0 0.0
    %1362 = vmatpush1.msra.mxu0 0.0
    %1363 = vmatprep.subr.mxu0 0.0
    %1364 = vmatpush1.msra.mxu0 0.0
    %1365 = vmatprep.subr.mxu0 0.0
    %1366 = vmatpush1.msra.mxu0 0.0
    %1367 = vmatprep.subr.mxu0 0.0
    %1368 = vmatpush1.msra.mxu0 0.0
    %1369 = vmatprep.subr.mxu0 0.0
    %1370 = vmatpush1.msra.mxu0 0.0
    %1371 = vmatprep.subr.mxu0 0.0
    %1372 = vmatpush1.msra.mxu0 0.0
    %1373 = vmatprep.subr.mxu0 0.0
    %1374 = vmatpush1.msra.mxu0 0.0
    %1375 = vmatprep.subr.mxu0 0.0
    %1376 = vmatpush1.msra.mxu0 0.0
    %1377 = vmatprep.subr.mxu0 0.0
    %1378 = vmatpush1.msra.mxu0 0.0
    %1379 = vmatprep.subr.mxu0 0.0
    %1380 = vmatpush1.msra.mxu0 0.0
    %1381 = vmatprep.subr.mxu0 0.0
    %1382 = vmatpush1.msra.mxu0 0.0
    %1383 = vmatprep.subr.mxu0 0.0
    %1384 = vmatpush1.msra.mxu0 0.0
    %1385 = vmatprep.subr.mxu0 0.0
    %1386 = vmatpush1.msra.mxu0 0.0
    %1387 = vmatprep.subr.mxu0 0.0
    %1388 = vmatpush1.msra.mxu0 0.0
    %1389 = vmatprep.subr.mxu0 0.0
    %1390 = vmatpush1.msra.mxu0 0.0
    %1391 = vmatprep.mubr.f32.mxu0 0.0
    %v1392 = vand.u32 %v733, 4294901760
    %1393 = vmatmul.mubr.f32.gmra.mrb[0].mxu0 %v1392
    %v1394 = vpop.f32.mrb[0].mxu0
    %v1395 = vadd.f32 %v1308, %v1394
    %v1396 = vpop.f32.mrb[0].mxu0
    %1397 = vdwg.mxu0
    %v1398 = vmax.f32 %v1395, 0.0
    %v1399 = vld [vmem:[#allocation7] sm:$0xff]
    %v1400 = vld [vmem:[#allocation7 + $0x8] sm:$0xff]
    %v1401 = vld [vmem:[#allocation7 + $0x10] sm:$0xff]
    %v1402 = vld [vmem:[#allocation7 + $0x18] sm:$0xff]
    %v1403 = vld [vmem:[#allocation7 + $0x20] sm:$0xff]
    %v1404 = vld [vmem:[#allocation7 + $0x28] sm:$0xff]
    %v1405 = vld [vmem:[#allocation7 + $0x30] sm:$0xff]
    %v1406 = vld [vmem:[#allocation7 + $0x38] sm:$0xff]
    %v1407 = vld [vmem:[#allocation7 + $0x40] sm:$0xff]
    %v1408 = vld [vmem:[#allocation7 + $0x48] sm:$0xff]
    %v1409 = vld [vmem:[#allocation7 + $0x50] sm:$0xff]
    %v1410 = vld [vmem:[#allocation7 + $0x58] sm:$0xff]
    %v1411 = vld [vmem:[#allocation7 + $0x60] sm:$0xff]
    %v1412 = vld [vmem:[#allocation7 + $0x68] sm:$0xff]
    %v1413 = vld [vmem:[#allocation7 + $0x70] sm:$0xff]
    %v1414 = vld [vmem:[#allocation7 + $0x78] sm:$0xff]
    %v1415 = vld [vmem:[%s6] sm:$0x1]
    %v1417 = vlaneseq
    %v1418 = vshrl.u32 %v1417, 7
    %v1419 = vsub.s32 0, %v1418
    %v1420 = vrot.slane %v1415, %v1419
    %1422 = vmatprep.subr.mxu0 0.0
    %v1423 = vand.u32 %v1399, 4294901760
    %1424 = vmatpush1.msra.mxu0 %v1423
    %1425 = vmatprep.subr.mxu0 0.0
    %v1426 = vand.u32 %v1400, 4294901760
    %1427 = vmatpush1.msra.mxu0 %v1426
    %1428 = vmatprep.subr.mxu0 0.0
    %v1429 = vand.u32 %v1401, 4294901760
    %1430 = vmatpush1.msra.mxu0 %v1429
    %1431 = vmatprep.subr.mxu0 0.0
    %v1432 = vand.u32 %v1402, 4294901760
    %1433 = vmatpush1.msra.mxu0 %v1432
    %1434 = vmatprep.subr.mxu0 0.0
    %v1435 = vand.u32 %v1403, 4294901760
    %1436 = vmatpush1.msra.mxu0 %v1435
    %1437 = vmatprep.subr.mxu0 0.0
    %v1438 = vand.u32 %v1404, 4294901760
    %1439 = vmatpush1.msra.mxu0 %v1438
    %1440 = vmatprep.subr.mxu0 0.0
    %v1441 = vand.u32 %v1405, 4294901760
    %1442 = vmatpush1.msra.mxu0 %v1441
    %1443 = vmatprep.subr.mxu0 0.0
    %v1444 = vand.u32 %v1406, 4294901760
    %1445 = vmatpush1.msra.mxu0 %v1444
    %1446 = vmatprep.subr.mxu0 0.0
    %v1447 = vand.u32 %v1407, 4294901760
    %1448 = vmatpush1.msra.mxu0 %v1447
    %1449 = vmatprep.subr.mxu0 0.0
    %v1450 = vand.u32 %v1408, 4294901760
    %1451 = vmatpush1.msra.mxu0 %v1450
    %1452 = vmatprep.subr.mxu0 0.0
    %v1453 = vand.u32 %v1409, 4294901760
    %1454 = vmatpush1.msra.mxu0 %v1453
    %1455 = vmatprep.subr.mxu0 0.0
    %v1456 = vand.u32 %v1410, 4294901760
    %1457 = vmatpush1.msra.mxu0 %v1456
    %1458 = vmatprep.subr.mxu0 0.0
    %v1459 = vand.u32 %v1411, 4294901760
    %1460 = vmatpush1.msra.mxu0 %v1459
    %1461 = vmatprep.subr.mxu0 0.0
    %v1462 = vand.u32 %v1412, 4294901760
    %1463 = vmatpush1.msra.mxu0 %v1462
    %1464 = vmatprep.subr.mxu0 0.0
    %v1465 = vand.u32 %v1413, 4294901760
    %1466 = vmatpush1.msra.mxu0 %v1465
    %1467 = vmatprep.subr.mxu0 0.0
    %v1468 = vand.u32 %v1414, 4294901760
    %1469 = vmatpush1.msra.mxu0 %v1468
    %1470 = vmatprep.subr.mxu0 0.0
    %1471 = vmatpush1.msra.mxu0 0.0
    %1472 = vmatprep.subr.mxu0 0.0
    %1473 = vmatpush1.msra.mxu0 0.0
    %1474 = vmatprep.subr.mxu0 0.0
    %1475 = vmatpush1.msra.mxu0 0.0
    %1476 = vmatprep.subr.mxu0 0.0
    %1477 = vmatpush1.msra.mxu0 0.0
    %1478 = vmatprep.subr.mxu0 0.0
    %1479 = vmatpush1.msra.mxu0 0.0
    %1480 = vmatprep.subr.mxu0 0.0
    %1481 = vmatpush1.msra.mxu0 0.0
    %1482 = vmatprep.subr.mxu0 0.0
    %1483 = vmatpush1.msra.mxu0 0.0
    %1484 = vmatprep.subr.mxu0 0.0
    %1485 = vmatpush1.msra.mxu0 0.0
    %1486 = vmatprep.subr.mxu0 0.0
    %1487 = vmatpush1.msra.mxu0 0.0
    %1488 = vmatprep.subr.mxu0 0.0
    %1489 = vmatpush1.msra.mxu0 0.0
    %1490 = vmatprep.subr.mxu0 0.0
    %1491 = vmatpush1.msra.mxu0 0.0
    %1492 = vmatprep.subr.mxu0 0.0
    %1493 = vmatpush1.msra.mxu0 0.0
    %1494 = vmatprep.subr.mxu0 0.0
    %1495 = vmatpush1.msra.mxu0 0.0
    %1496 = vmatprep.subr.mxu0 0.0
    %1497 = vmatpush1.msra.mxu0 0.0
    %1498 = vmatprep.subr.mxu0 0.0
    %1499 = vmatpush1.msra.mxu0 0.0
    %1500 = vmatprep.subr.mxu0 0.0
    %1501 = vmatpush1.msra.mxu0 0.0
    %1502 = vmatprep.mubr.f32.mxu0 0.0
    %v1503 = vand.u32 %v1398, 4294901760
    %v1504 = vsub.f32 %v1398, %v1503
    %v1505 = vand.u32 %v1504, 4294901760
    %v1506 = vsub.f32 %v1504, %v1505
    %v1507 = vand.u32 %v1506, 4294901760
    %1508 = vmatmul.mubr.f32.gmra.mrb[0].mxu0 %v1507
    %v1509 = vpop.f32.mrb[0].mxu0
    %v1510 = vadd.f32 %v1420, %v1509
    %v1511 = vpop.f32.mrb[0].mxu0
    %1512 = vdwg.mxu0
    %1513 = vmatprep.subr.mxu0 0.0
    %v1514 = vand.u32 %v1399, 4294901760
    %v1515 = vsub.f32 %v1399, %v1514
    %v1516 = vand.u32 %v1515, 4294901760
    %v1517 = vsub.f32 %v1515, %v1516
    %v1518 = vand.u32 %v1517, 4294901760
    %1519 = vmatpush1.msra.mxu0 %v1518
    %1520 = vmatprep.subr.mxu0 0.0
    %v1521 = vand.u32 %v1400, 4294901760
    %v1522 = vsub.f32 %v1400, %v1521
    %v1523 = vand.u32 %v1522, 4294901760
    %v1524 = vsub.f32 %v1522, %v1523
    %v1525 = vand.u32 %v1524, 4294901760
    %1526 = vmatpush1.msra.mxu0 %v1525
    %1527 = vmatprep.subr.mxu0 0.0
    %v1528 = vand.u32 %v1401, 4294901760
    %v1529 = vsub.f32 %v1401, %v1528
    %v1530 = vand.u32 %v1529, 4294901760
    %v1531 = vsub.f32 %v1529, %v1530
    %v1532 = vand.u32 %v1531, 4294901760
    %1533 = vmatpush1.msra.mxu0 %v1532
    %1534 = vmatprep.subr.mxu0 0.0
    %v1535 = vand.u32 %v1402, 4294901760
    %v1536 = vsub.f32 %v1402, %v1535
    %v1537 = vand.u32 %v1536, 4294901760
    %v1538 = vsub.f32 %v1536, %v1537
    %v1539 = vand.u32 %v1538, 4294901760
    %1540 = vmatpush1.msra.mxu0 %v1539
    %1541 = vmatprep.subr.mxu0 0.0
    %v1542 = vand.u32 %v1403, 4294901760
    %v1543 = vsub.f32 %v1403, %v1542
    %v1544 = vand.u32 %v1543, 4294901760
    %v1545 = vsub.f32 %v1543, %v1544
    %v1546 = vand.u32 %v1545, 4294901760
    %1547 = vmatpush1.msra.mxu0 %v1546
    %1548 = vmatprep.subr.mxu0 0.0
    %v1549 = vand.u32 %v1404, 4294901760
    %v1550 = vsub.f32 %v1404, %v1549
    %v1551 = vand.u32 %v1550, 4294901760
    %v1552 = vsub.f32 %v1550, %v1551
    %v1553 = vand.u32 %v1552, 4294901760
    %1554 = vmatpush1.msra.mxu0 %v1553
    %1555 = vmatprep.subr.mxu0 0.0
    %v1556 = vand.u32 %v1405, 4294901760
    %v1557 = vsub.f32 %v1405, %v1556
    %v1558 = vand.u32 %v1557, 4294901760
    %v1559 = vsub.f32 %v1557, %v1558
    %v1560 = vand.u32 %v1559, 4294901760
    %1561 = vmatpush1.msra.mxu0 %v1560
    %1562 = vmatprep.subr.mxu0 0.0
    %v1563 = vand.u32 %v1406, 4294901760
    %v1564 = vsub.f32 %v1406, %v1563
    %v1565 = vand.u32 %v1564, 4294901760
    %v1566 = vsub.f32 %v1564, %v1565
    %v1567 = vand.u32 %v1566, 4294901760
    %1568 = vmatpush1.msra.mxu0 %v1567
    %1569 = vmatprep.subr.mxu0 0.0
    %v1570 = vand.u32 %v1407, 4294901760
    %v1571 = vsub.f32 %v1407, %v1570
    %v1572 = vand.u32 %v1571, 4294901760
    %v1573 = vsub.f32 %v1571, %v1572
    %v1574 = vand.u32 %v1573, 4294901760
    %1575 = vmatpush1.msra.mxu0 %v1574
    %1576 = vmatprep.subr.mxu0 0.0
    %v1577 = vand.u32 %v1408, 4294901760
    %v1578 = vsub.f32 %v1408, %v1577
    %v1579 = vand.u32 %v1578, 4294901760
    %v1580 = vsub.f32 %v1578, %v1579
    %v1581 = vand.u32 %v1580, 4294901760
    %1582 = vmatpush1.msra.mxu0 %v1581
    %1583 = vmatprep.subr.mxu0 0.0
    %v1584 = vand.u32 %v1409, 4294901760
    %v1585 = vsub.f32 %v1409, %v1584
    %v1586 = vand.u32 %v1585, 4294901760
    %v1587 = vsub.f32 %v1585, %v1586
    %v1588 = vand.u32 %v1587, 4294901760
    %1589 = vmatpush1.msra.mxu0 %v1588
    %1590 = vmatprep.subr.mxu0 0.0
    %v1591 = vand.u32 %v1410, 4294901760
    %v1592 = vsub.f32 %v1410, %v1591
    %v1593 = vand.u32 %v1592, 4294901760
    %v1594 = vsub.f32 %v1592, %v1593
    %v1595 = vand.u32 %v1594, 4294901760
    %1596 = vmatpush1.msra.mxu0 %v1595
    %1597 = vmatprep.subr.mxu0 0.0
    %v1598 = vand.u32 %v1411, 4294901760
    %v1599 = vsub.f32 %v1411, %v1598
    %v1600 = vand.u32 %v1599, 4294901760
    %v1601 = vsub.f32 %v1599, %v1600
    %v1602 = vand.u32 %v1601, 4294901760
    %1603 = vmatpush1.msra.mxu0 %v1602
    %1604 = vmatprep.subr.mxu0 0.0
    %v1605 = vand.u32 %v1412, 4294901760
    %v1606 = vsub.f32 %v1412, %v1605
    %v1607 = vand.u32 %v1606, 4294901760
    %v1608 = vsub.f32 %v1606, %v1607
    %v1609 = vand.u32 %v1608, 4294901760
    %1610 = vmatpush1.msra.mxu0 %v1609
    %1611 = vmatprep.subr.mxu0 0.0
    %v1612 = vand.u32 %v1413, 4294901760
    %v1613 = vsub.f32 %v1413, %v1612
    %v1614 = vand.u32 %v1613, 4294901760
    %v1615 = vsub.f32 %v1613, %v1614
    %v1616 = vand.u32 %v1615, 4294901760
    %1617 = vmatpush1.msra.mxu0 %v1616
    %1618 = vmatprep.subr.mxu0 0.0
    %v1619 = vand.u32 %v1414, 4294901760
    %v1620 = vsub.f32 %v1414, %v1619
    %v1621 = vand.u32 %v1620, 4294901760
    %v1622 = vsub.f32 %v1620, %v1621
    %v1623 = vand.u32 %v1622, 4294901760
    %1624 = vmatpush1.msra.mxu0 %v1623
    %1625 = vmatprep.subr.mxu0 0.0
    %1626 = vmatpush1.msra.mxu0 0.0
    %1627 = vmatprep.subr.mxu0 0.0
    %1628 = vmatpush1.msra.mxu0 0.0
    %1629 = vmatprep.subr.mxu0 0.0
    %1630 = vmatpush1.msra.mxu0 0.0
    %1631 = vmatprep.subr.mxu0 0.0
    %1632 = vmatpush1.msra.mxu0 0.0
    %1633 = vmatprep.subr.mxu0 0.0
    %1634 = vmatpush1.msra.mxu0 0.0
    %1635 = vmatprep.subr.mxu0 0.0
    %1636 = vmatpush1.msra.mxu0 0.0
    %1637 = vmatprep.subr.mxu0 0.0
    %1638 = vmatpush1.msra.mxu0 0.0
    %1639 = vmatprep.subr.mxu0 0.0
    %1640 = vmatpush1.msra.mxu0 0.0
    %1641 = vmatprep.subr.mxu0 0.0
    %1642 = vmatpush1.msra.mxu0 0.0
    %1643 = vmatprep.subr.mxu0 0.0
    %1644 = vmatpush1.msra.mxu0 0.0
    %1645 = vmatprep.subr.mxu0 0.0
    %1646 = vmatpush1.msra.mxu0 0.0
    %1647 = vmatprep.subr.mxu0 0.0
    %1648 = vmatpush1.msra.mxu0 0.0
    %1649 = vmatprep.subr.mxu0 0.0
    %1650 = vmatpush1.msra.mxu0 0.0
    %1651 = vmatprep.subr.mxu0 0.0
    %1652 = vmatpush1.msra.mxu0 0.0
    %1653 = vmatprep.subr.mxu0 0.0
    %1654 = vmatpush1.msra.mxu0 0.0
    %1655 = vmatprep.subr.mxu0 0.0
    %1656 = vmatpush1.msra.mxu0 0.0
    %1657 = vmatprep.mubr.f32.mxu0 0.0
    %v1658 = vand.u32 %v1398, 4294901760
    %1659 = vmatmul.mubr.f32.gmra.mrb[0].mxu0 %v1658
    %v1660 = vpop.f32.mrb[0].mxu0
    %v1661 = vadd.f32 %v1510, %v1660
    %v1662 = vpop.f32.mrb[0].mxu0
    %1663 = vdwg.mxu0
    %1664 = vmatprep.subr.mxu0 0.0
    %v1665 = vand.u32 %v1399, 4294901760
    %v1666 = vsub.f32 %v1399, %v1665
    %1667 = vmatpush1.msra.mxu0 %v1666
    %1668 = vmatprep.subr.mxu0 0.0
    %v1669 = vand.u32 %v1400, 4294901760
    %v1670 = vsub.f32 %v1400, %v1669
    %1671 = vmatpush1.msra.mxu0 %v1670
    %1672 = vmatprep.subr.mxu0 0.0
    %v1673 = vand.u32 %v1401, 4294901760
    %v1674 = vsub.f32 %v1401, %v1673
    %1675 = vmatpush1.msra.mxu0 %v1674
    %1676 = vmatprep.subr.mxu0 0.0
    %v1677 = vand.u32 %v1402, 4294901760
    %v1678 = vsub.f32 %v1402, %v1677
    %1679 = vmatpush1.msra.mxu0 %v1678
    %1680 = vmatprep.subr.mxu0 0.0
    %v1681 = vand.u32 %v1403, 4294901760
    %v1682 = vsub.f32 %v1403, %v1681
    %1683 = vmatpush1.msra.mxu0 %v1682
    %1684 = vmatprep.subr.mxu0 0.0
    %v1685 = vand.u32 %v1404, 4294901760
    %v1686 = vsub.f32 %v1404, %v1685
    %1687 = vmatpush1.msra.mxu0 %v1686
    %1688 = vmatprep.subr.mxu0 0.0
    %v1689 = vand.u32 %v1405, 4294901760
    %v1690 = vsub.f32 %v1405, %v1689
    %1691 = vmatpush1.msra.mxu0 %v1690
    %1692 = vmatprep.subr.mxu0 0.0
    %v1693 = vand.u32 %v1406, 4294901760
    %v1694 = vsub.f32 %v1406, %v1693
    %1695 = vmatpush1.msra.mxu0 %v1694
    %1696 = vmatprep.subr.mxu0 0.0
    %v1697 = vand.u32 %v1407, 4294901760
    %v1698 = vsub.f32 %v1407, %v1697
    %1699 = vmatpush1.msra.mxu0 %v1698
    %1700 = vmatprep.subr.mxu0 0.0
    %v1701 = vand.u32 %v1408, 4294901760
    %v1702 = vsub.f32 %v1408, %v1701
    %1703 = vmatpush1.msra.mxu0 %v1702
    %1704 = vmatprep.subr.mxu0 0.0
    %v1705 = vand.u32 %v1409, 4294901760
    %v1706 = vsub.f32 %v1409, %v1705
    %1707 = vmatpush1.msra.mxu0 %v1706
    %1708 = vmatprep.subr.mxu0 0.0
    %v1709 = vand.u32 %v1410, 4294901760
    %v1710 = vsub.f32 %v1410, %v1709
    %1711 = vmatpush1.msra.mxu0 %v1710
    %1712 = vmatprep.subr.mxu0 0.0
    %v1713 = vand.u32 %v1411, 4294901760
    %v1714 = vsub.f32 %v1411, %v1713
    %1715 = vmatpush1.msra.mxu0 %v1714
    %1716 = vmatprep.subr.mxu0 0.0
    %v1717 = vand.u32 %v1412, 4294901760
    %v1718 = vsub.f32 %v1412, %v1717
    %1719 = vmatpush1.msra.mxu0 %v1718
    %1720 = vmatprep.subr.mxu0 0.0
    %v1721 = vand.u32 %v1413, 4294901760
    %v1722 = vsub.f32 %v1413, %v1721
    %1723 = vmatpush1.msra.mxu0 %v1722
    %1724 = vmatprep.subr.mxu0 0.0
    %v1725 = vand.u32 %v1414, 4294901760
    %v1726 = vsub.f32 %v1414, %v1725
    %1727 = vmatpush1.msra.mxu0 %v1726
    %1728 = vmatprep.subr.mxu0 0.0
    %1729 = vmatpush1.msra.mxu0 0.0
    %1730 = vmatprep.subr.mxu0 0.0
    %1731 = vmatpush1.msra.mxu0 0.0
    %1732 = vmatprep.subr.mxu0 0.0
    %1733 = vmatpush1.msra.mxu0 0.0
    %1734 = vmatprep.subr.mxu0 0.0
    %1735 = vmatpush1.msra.mxu0 0.0
    %1736 = vmatprep.subr.mxu0 0.0
    %1737 = vmatpush1.msra.mxu0 0.0
    %1738 = vmatprep.subr.mxu0 0.0
    %1739 = vmatpush1.msra.mxu0 0.0
    %1740 = vmatprep.subr.mxu0 0.0
    %1741 = vmatpush1.msra.mxu0 0.0
    %1742 = vmatprep.subr.mxu0 0.0
    %1743 = vmatpush1.msra.mxu0 0.0
    %1744 = vmatprep.subr.mxu0 0.0
    %1745 = vmatpush1.msra.mxu0 0.0
    %1746 = vmatprep.subr.mxu0 0.0
    %1747 = vmatpush1.msra.mxu0 0.0
    %1748 = vmatprep.subr.mxu0 0.0
    %1749 = vmatpush1.msra.mxu0 0.0
    %1750 = vmatprep.subr.mxu0 0.0
    %1751 = vmatpush1.msra.mxu0 0.0
    %1752 = vmatprep.subr.mxu0 0.0
    %1753 = vmatpush1.msra.mxu0 0.0
    %1754 = vmatprep.subr.mxu0 0.0
    %1755 = vmatpush1.msra.mxu0 0.0
    %1756 = vmatprep.subr.mxu0 0.0
    %1757 = vmatpush1.msra.mxu0 0.0
    %1758 = vmatprep.subr.mxu0 0.0
    %1759 = vmatpush1.msra.mxu0 0.0
    %1760 = vmatprep.mubr.f32.mxu0 0.0
    %v1761 = vand.u32 %v1398, 4294901760
    %v1762 = vsub.f32 %v1398, %v1761
    %1763 = vmatmul.mubr.f32.gmra.mrb[0].mxu0 %v1762
    %v1764 = vpop.f32.mrb[0].mxu0
    %v1765 = vadd.f32 %v1661, %v1764
    %v1766 = vpop.f32.mrb[0].mxu0
    %1767 = vdwg.mxu0
    %1768 = vmatprep.subr.mxu0 0.0
    %v1769 = vand.u32 %v1399, 4294901760
    %1770 = vmatpush1.msra.mxu0 %v1769
    %1771 = vmatprep.subr.mxu0 0.0
    %v1772 = vand.u32 %v1400, 4294901760
    %1773 = vmatpush1.msra.mxu0 %v1772
    %1774 = vmatprep.subr.mxu0 0.0
    %v1775 = vand.u32 %v1401, 4294901760
    %1776 = vmatpush1.msra.mxu0 %v1775
    %1777 = vmatprep.subr.mxu0 0.0
    %v1778 = vand.u32 %v1402, 4294901760
    %1779 = vmatpush1.msra.mxu0 %v1778
    %1780 = vmatprep.subr.mxu0 0.0
    %v1781 = vand.u32 %v1403, 4294901760
    %1782 = vmatpush1.msra.mxu0 %v1781
    %1783 = vmatprep.subr.mxu0 0.0
    %v1784 = vand.u32 %v1404, 4294901760
    %1785 = vmatpush1.msra.mxu0 %v1784
    %1786 = vmatprep.subr.mxu0 0.0
    %v1787 = vand.u32 %v1405, 4294901760
    %1788 = vmatpush1.msra.mxu0 %v1787
    %1789 = vmatprep.subr.mxu0 0.0
    %v1790 = vand.u32 %v1406, 4294901760
    %1791 = vmatpush1.msra.mxu0 %v1790
    %1792 = vmatprep.subr.mxu0 0.0
    %v1793 = vand.u32 %v1407, 4294901760
    %1794 = vmatpush1.msra.mxu0 %v1793
    %1795 = vmatprep.subr.mxu0 0.0
    %v1796 = vand.u32 %v1408, 4294901760
    %1797 = vmatpush1.msra.mxu0 %v1796
    %1798 = vmatprep.subr.mxu0 0.0
    %v1799 = vand.u32 %v1409, 4294901760
    %1800 = vmatpush1.msra.mxu0 %v1799
    %1801 = vmatprep.subr.mxu0 0.0
    %v1802 = vand.u32 %v1410, 4294901760
    %1803 = vmatpush1.msra.mxu0 %v1802
    %1804 = vmatprep.subr.mxu0 0.0
    %v1805 = vand.u32 %v1411, 4294901760
    %1806 = vmatpush1.msra.mxu0 %v1805
    %1807 = vmatprep.subr.mxu0 0.0
    %v1808 = vand.u32 %v1412, 4294901760
    %1809 = vmatpush1.msra.mxu0 %v1808
    %1810 = vmatprep.subr.mxu0 0.0
    %v1811 = vand.u32 %v1413, 4294901760
    %1812 = vmatpush1.msra.mxu0 %v1811
    %1813 = vmatprep.subr.mxu0 0.0
    %v1814 = vand.u32 %v1414, 4294901760
    %1815 = vmatpush1.msra.mxu0 %v1814
    %1816 = vmatprep.subr.mxu0 0.0
    %1817 = vmatpush1.msra.mxu0 0.0
    %1818 = vmatprep.subr.mxu0 0.0
    %1819 = vmatpush1.msra.mxu0 0.0
    %1820 = vmatprep.subr.mxu0 0.0
    %1821 = vmatpush1.msra.mxu0 0.0
    %1822 = vmatprep.subr.mxu0 0.0
    %1823 = vmatpush1.msra.mxu0 0.0
    %1824 = vmatprep.subr.mxu0 0.0
    %1825 = vmatpush1.msra.mxu0 0.0
    %1826 = vmatprep.subr.mxu0 0.0
    %1827 = vmatpush1.msra.mxu0 0.0
    %1828 = vmatprep.subr.mxu0 0.0
    %1829 = vmatpush1.msra.mxu0 0.0
    %1830 = vmatprep.subr.mxu0 0.0
    %1831 = vmatpush1.msra.mxu0 0.0
    %1832 = vmatprep.subr.mxu0 0.0
    %1833 = vmatpush1.msra.mxu0 0.0
    %1834 = vmatprep.subr.mxu0 0.0
    %1835 = vmatpush1.msra.mxu0 0.0
    %1836 = vmatprep.subr.mxu0 0.0
    %1837 = vmatpush1.msra.mxu0 0.0
    %1838 = vmatprep.subr.mxu0 0.0
    %1839 = vmatpush1.msra.mxu0 0.0
    %1840 = vmatprep.subr.mxu0 0.0
    %1841 = vmatpush1.msra.mxu0 0.0
    %1842 = vmatprep.subr.mxu0 0.0
    %1843 = vmatpush1.msra.mxu0 0.0
    %1844 = vmatprep.subr.mxu0 0.0
    %1845 = vmatpush1.msra.mxu0 0.0
    %1846 = vmatprep.subr.mxu0 0.0
    %1847 = vmatpush1.msra.mxu0 0.0
    %1848 = vmatprep.mubr.f32.mxu0 0.0
    %v1849 = vand.u32 %v1398, 4294901760
    %v1850 = vsub.f32 %v1398, %v1849
    %v1851 = vand.u32 %v1850, 4294901760
    %1852 = vmatmul.mubr.f32.gmra.mrb[0].mxu0 %v1851
    %v1853 = vpop.f32.mrb[0].mxu0
    %v1854 = vadd.f32 %v1765, %v1853
    %v1855 = vpop.f32.mrb[0].mxu0
    %1856 = vdwg.mxu0
    %1857 = vmatprep.subr.mxu0 0.0
    %v1858 = vand.u32 %v1399, 4294901760
    %v1859 = vsub.f32 %v1399, %v1858
    %v1860 = vand.u32 %v1859, 4294901760
    %1861 = vmatpush1.msra.mxu0 %v1860
    %1862 = vmatprep.subr.mxu0 0.0
    %v1863 = vand.u32 %v1400, 4294901760
    %v1864 = vsub.f32 %v1400, %v1863
    %v1865 = vand.u32 %v1864, 4294901760
    %1866 = vmatpush1.msra.mxu0 %v1865
    %1867 = vmatprep.subr.mxu0 0.0
    %v1868 = vand.u32 %v1401, 4294901760
    %v1869 = vsub.f32 %v1401, %v1868
    %v1870 = vand.u32 %v1869, 4294901760
    %1871 = vmatpush1.msra.mxu0 %v1870
    %1872 = vmatprep.subr.mxu0 0.0
    %v1873 = vand.u32 %v1402, 4294901760
    %v1874 = vsub.f32 %v1402, %v1873
    %v1875 = vand.u32 %v1874, 4294901760
    %1876 = vmatpush1.msra.mxu0 %v1875
    %1877 = vmatprep.subr.mxu0 0.0
    %v1878 = vand.u32 %v1403, 4294901760
    %v1879 = vsub.f32 %v1403, %v1878
    %v1880 = vand.u32 %v1879, 4294901760
    %1881 = vmatpush1.msra.mxu0 %v1880
    %1882 = vmatprep.subr.mxu0 0.0
    %v1883 = vand.u32 %v1404, 4294901760
    %v1884 = vsub.f32 %v1404, %v1883
    %v1885 = vand.u32 %v1884, 4294901760
    %1886 = vmatpush1.msra.mxu0 %v1885
    %1887 = vmatprep.subr.mxu0 0.0
    %v1888 = vand.u32 %v1405, 4294901760
    %v1889 = vsub.f32 %v1405, %v1888
    %v1890 = vand.u32 %v1889, 4294901760
    %1891 = vmatpush1.msra.mxu0 %v1890
    %1892 = vmatprep.subr.mxu0 0.0
    %v1893 = vand.u32 %v1406, 4294901760
    %v1894 = vsub.f32 %v1406, %v1893
    %v1895 = vand.u32 %v1894, 4294901760
    %1896 = vmatpush1.msra.mxu0 %v1895
    %1897 = vmatprep.subr.mxu0 0.0
    %v1898 = vand.u32 %v1407, 4294901760
    %v1899 = vsub.f32 %v1407, %v1898
    %v1900 = vand.u32 %v1899, 4294901760
    %1901 = vmatpush1.msra.mxu0 %v1900
    %1902 = vmatprep.subr.mxu0 0.0
    %v1903 = vand.u32 %v1408, 4294901760
    %v1904 = vsub.f32 %v1408, %v1903
    %v1905 = vand.u32 %v1904, 4294901760
    %1906 = vmatpush1.msra.mxu0 %v1905
    %1907 = vmatprep.subr.mxu0 0.0
    %v1908 = vand.u32 %v1409, 4294901760
    %v1909 = vsub.f32 %v1409, %v1908
    %v1910 = vand.u32 %v1909, 4294901760
    %1911 = vmatpush1.msra.mxu0 %v1910
    %1912 = vmatprep.subr.mxu0 0.0
    %v1913 = vand.u32 %v1410, 4294901760
    %v1914 = vsub.f32 %v1410, %v1913
    %v1915 = vand.u32 %v1914, 4294901760
    %1916 = vmatpush1.msra.mxu0 %v1915
    %1917 = vmatprep.subr.mxu0 0.0
    %v1918 = vand.u32 %v1411, 4294901760
    %v1919 = vsub.f32 %v1411, %v1918
    %v1920 = vand.u32 %v1919, 4294901760
    %1921 = vmatpush1.msra.mxu0 %v1920
    %1922 = vmatprep.subr.mxu0 0.0
    %v1923 = vand.u32 %v1412, 4294901760
    %v1924 = vsub.f32 %v1412, %v1923
    %v1925 = vand.u32 %v1924, 4294901760
    %1926 = vmatpush1.msra.mxu0 %v1925
    %1927 = vmatprep.subr.mxu0 0.0
    %v1928 = vand.u32 %v1413, 4294901760
    %v1929 = vsub.f32 %v1413, %v1928
    %v1930 = vand.u32 %v1929, 4294901760
    %1931 = vmatpush1.msra.mxu0 %v1930
    %1932 = vmatprep.subr.mxu0 0.0
    %v1933 = vand.u32 %v1414, 4294901760
    %v1934 = vsub.f32 %v1414, %v1933
    %v1935 = vand.u32 %v1934, 4294901760
    %1936 = vmatpush1.msra.mxu0 %v1935
    %1937 = vmatprep.subr.mxu0 0.0
    %1938 = vmatpush1.msra.mxu0 0.0
    %1939 = vmatprep.subr.mxu0 0.0
    %1940 = vmatpush1.msra.mxu0 0.0
    %1941 = vmatprep.subr.mxu0 0.0
    %1942 = vmatpush1.msra.mxu0 0.0
    %1943 = vmatprep.subr.mxu0 0.0
    %1944 = vmatpush1.msra.mxu0 0.0
    %1945 = vmatprep.subr.mxu0 0.0
    %1946 = vmatpush1.msra.mxu0 0.0
    %1947 = vmatprep.subr.mxu0 0.0
    %1948 = vmatpush1.msra.mxu0 0.0
    %1949 = vmatprep.subr.mxu0 0.0
    %1950 = vmatpush1.msra.mxu0 0.0
    %1951 = vmatprep.subr.mxu0 0.0
    %1952 = vmatpush1.msra.mxu0 0.0
    %1953 = vmatprep.subr.mxu0 0.0
    %1954 = vmatpush1.msra.mxu0 0.0
    %1955 = vmatprep.subr.mxu0 0.0
    %1956 = vmatpush1.msra.mxu0 0.0
    %1957 = vmatprep.subr.mxu0 0.0
    %1958 = vmatpush1.msra.mxu0 0.0
    %1959 = vmatprep.subr.mxu0 0.0
    %1960 = vmatpush1.msra.mxu0 0.0
    %1961 = vmatprep.subr.mxu0 0.0
    %1962 = vmatpush1.msra.mxu0 0.0
    %1963 = vmatprep.subr.mxu0 0.0
    %1964 = vmatpush1.msra.mxu0 0.0
    %1965 = vmatprep.subr.mxu0 0.0
    %1966 = vmatpush1.msra.mxu0 0.0
    %1967 = vmatprep.subr.mxu0 0.0
    %1968 = vmatpush1.msra.mxu0 0.0
    %1969 = vmatprep.mubr.f32.mxu0 0.0
    %v1970 = vand.u32 %v1398, 4294901760
    %1971 = vmatmul.mubr.f32.gmra.mrb[0].mxu0 %v1970
    %v1972 = vpop.f32.mrb[0].mxu0
    %v1973 = vadd.f32 %v1854, %v1972
    %v1974 = vpop.f32.mrb[0].mxu0
    %1975 = vdwg.mxu0
    %1976 = vmatprep.subr.mxu0 0.0
    %v1977 = vand.u32 %v1399, 4294901760
    %1978 = vmatpush1.msra.mxu0 %v1977
    %1979 = vmatprep.subr.mxu0 0.0
    %v1980 = vand.u32 %v1400, 4294901760
    %1981 = vmatpush1.msra.mxu0 %v1980
    %1982 = vmatprep.subr.mxu0 0.0
    %v1983 = vand.u32 %v1401, 4294901760
    %1984 = vmatpush1.msra.mxu0 %v1983
    %1985 = vmatprep.subr.mxu0 0.0
    %v1986 = vand.u32 %v1402, 4294901760
    %1987 = vmatpush1.msra.mxu0 %v1986
    %1988 = vmatprep.subr.mxu0 0.0
    %v1989 = vand.u32 %v1403, 4294901760
    %1990 = vmatpush1.msra.mxu0 %v1989
    %1991 = vmatprep.subr.mxu0 0.0
    %v1992 = vand.u32 %v1404, 4294901760
    %1993 = vmatpush1.msra.mxu0 %v1992
    %1994 = vmatprep.subr.mxu0 0.0
    %v1995 = vand.u32 %v1405, 4294901760
    %1996 = vmatpush1.msra.mxu0 %v1995
    %1997 = vmatprep.subr.mxu0 0.0
    %v1998 = vand.u32 %v1406, 4294901760
    %1999 = vmatpush1.msra.mxu0 %v1998
    %2000 = vmatprep.subr.mxu0 0.0
    %v2001 = vand.u32 %v1407, 4294901760
    %2002 = vmatpush1.msra.mxu0 %v2001
    %2003 = vmatprep.subr.mxu0 0.0
    %v2004 = vand.u32 %v1408, 4294901760
    %2005 = vmatpush1.msra.mxu0 %v2004
    %2006 = vmatprep.subr.mxu0 0.0
    %v2007 = vand.u32 %v1409, 4294901760
    %2008 = vmatpush1.msra.mxu0 %v2007
    %2009 = vmatprep.subr.mxu0 0.0
    %v2010 = vand.u32 %v1410, 4294901760
    %2011 = vmatpush1.msra.mxu0 %v2010
    %2012 = vmatprep.subr.mxu0 0.0
    %v2013 = vand.u32 %v1411, 4294901760
    %2014 = vmatpush1.msra.mxu0 %v2013
    %2015 = vmatprep.subr.mxu0 0.0
    %v2016 = vand.u32 %v1412, 4294901760
    %2017 = vmatpush1.msra.mxu0 %v2016
    %2018 = vmatprep.subr.mxu0 0.0
    %v2019 = vand.u32 %v1413, 4294901760
    %2020 = vmatpush1.msra.mxu0 %v2019
    %2021 = vmatprep.subr.mxu0 0.0
    %v2022 = vand.u32 %v1414, 4294901760
    %2023 = vmatpush1.msra.mxu0 %v2022
    %2024 = vmatprep.subr.mxu0 0.0
    %2025 = vmatpush1.msra.mxu0 0.0
    %2026 = vmatprep.subr.mxu0 0.0
    %2027 = vmatpush1.msra.mxu0 0.0
    %2028 = vmatprep.subr.mxu0 0.0
    %2029 = vmatpush1.msra.mxu0 0.0
    %2030 = vmatprep.subr.mxu0 0.0
    %2031 = vmatpush1.msra.mxu0 0.0
    %2032 = vmatprep.subr.mxu0 0.0
    %2033 = vmatpush1.msra.mxu0 0.0
    %2034 = vmatprep.subr.mxu0 0.0
    %2035 = vmatpush1.msra.mxu0 0.0
    %2036 = vmatprep.subr.mxu0 0.0
    %2037 = vmatpush1.msra.mxu0 0.0
    %2038 = vmatprep.subr.mxu0 0.0
    %2039 = vmatpush1.msra.mxu0 0.0
    %2040 = vmatprep.subr.mxu0 0.0
    %2041 = vmatpush1.msra.mxu0 0.0
    %2042 = vmatprep.subr.mxu0 0.0
    %2043 = vmatpush1.msra.mxu0 0.0
    %2044 = vmatprep.subr.mxu0 0.0
    %2045 = vmatpush1.msra.mxu0 0.0
    %2046 = vmatprep.subr.mxu0 0.0
    %2047 = vmatpush1.msra.mxu0 0.0
    %2048 = vmatprep.subr.mxu0 0.0
    %2049 = vmatpush1.msra.mxu0 0.0
    %2050 = vmatprep.subr.mxu0 0.0
    %2051 = vmatpush1.msra.mxu0 0.0
    %2052 = vmatprep.subr.mxu0 0.0
    %2053 = vmatpush1.msra.mxu0 0.0
    %2054 = vmatprep.subr.mxu0 0.0
    %2055 = vmatpush1.msra.mxu0 0.0
    %2056 = vmatprep.mubr.f32.mxu0 0.0
    %v2057 = vand.u32 %v1398, 4294901760
    %2058 = vmatmul.mubr.f32.gmra.mrb[0].mxu0 %v2057
    %v2059 = vpop.f32.mrb[0].mxu0
    %v2060 = vadd.f32 %v1973, %v2059
    %v2061 = vpop.f32.mrb[0].mxu0
    %2062 = vdwg.mxu0
    %v2063 = vxor.u32 %v2060, 2147483648
    %v2064 = vmul.f32 %v2063, 1.442695
    %v2065 = vpow.pop %v2064
    %v2066 = vadd.f32 %v2065, 1.0
    %v2067 = vrcp.pop %v2066
    %v2068 = vmul.f32 1.0, %v2067
    %2069 = vst [vmem:[#allocation8] sm:$0xff] %v2068
    // Predicated region
    $region42: #{mlp_forward.1} parent=1 // pred_check
      _
    $region43: #{mlp_forward.1} parent=1 // pred_check_branch
      %2071 = sbr.rel (0) target = $region45
    $region44: #{mlp_forward.1} parent=1 // pred_region
      %s2073 = ssub.s32 128, 128
      %2074 = vsyncadd [#allocation4], %s2073
      %s2076 = sshll.u32 [#allocation8], 4
      %s2077 = int_to_ptr.vmem [resolvable:$true] %s2076
      %2079 = dma.vmem_to_hbm [thread:$0]  %s2077, 128, %s7, [#allocation4]
    $region45: #{mlp_forward.1} parent=1 // pred_fallthru
      _
    // Predicated region
    $region46: #{mlp_forward.1} parent=1 // pred_check
      _
    $region47: #{mlp_forward.1} parent=1 // pred_check_branch
      %2081 = sbr.rel (0) target = $region49
    $region48: #{mlp_forward.1} parent=1 // pred_region
      %2082 = dma.done [#allocation4], 128
    $region49: #{mlp_forward.1} parent=1 // pred_fallthru
      _
    %2083 = vsyncpa [#allocation3], 1
    %2084 = vsyncpa [#allocation6], 1
    %2085 = vsyncpa [#allocation4], 1

</llo_original>
